<compile_context>
chip_gen: v7x
topology: tpu7x:2x2x1
jax: 0.10.0
libtpu: 0.0.40
codegen_flags: <defaults>
</compile_context>

<pallas_src>
import math

import jax
import jax.numpy as jnp
from jax.experimental import pallas as pl
from jax.experimental.pallas import tpu as pltpu

_BN_EPS = 1e-5


# ---------------------------------------------------------------------------
# host-side precompute (runs ONCE, hoisted out of the forward path)
# ---------------------------------------------------------------------------

def _bilinear_matrix(out_size, in_size):
    """Interpolation matrix matching F.interpolate(bilinear, align_corners=False)."""
    scale = in_size / out_size
    m = [[0.0] * in_size for _ in range(out_size)]
    for i in range(out_size):
        src = max((i + 0.5) * scale - 0.5, 0.0)
        i0 = min(int(math.floor(src)), in_size - 1)
        i1 = min(i0 + 1, in_size - 1)
        frac = src - i0
        m[i][i0] += 1.0 - frac
        m[i][i1] += frac
    return jnp.array(m, dtype=jnp.float32)


def _inv_boxcount(H, W, channels, scales):
    """1/N_s flattened to (n_scales, H*W); N_s = all-ones box filter of ones."""
    maps = []
    ih = jnp.arange(H)
    iw = jnp.arange(W)
    for s in scales:
        ch = jnp.minimum(ih + s, H - 1) - jnp.maximum(ih - s, 0) + 1
        cw = jnp.minimum(iw + s, W - 1) - jnp.maximum(iw - s, 0) + 1
        cnt = (ch[:, None] * cw[None, :]).astype(jnp.float32)
        maps.append(1.0 / (channels * cnt))
    return jnp.stack(maps, axis=0).reshape(len(scales), H * W)


def _bn_fold(bn):
    gamma, beta, mean, var = bn
    scale = gamma / jnp.sqrt(var + _BN_EPS)
    return scale, beta - mean * scale


def precompute_params(params, x_hw, lat_hw, scales):
    """Fold BN / scale weights / fusion into a few small dense arrays."""
    f32 = jnp.float32
    Hx, Wx = x_hw
    H, W = lat_hw
    C = params['w_sq'].shape[0]

    # bilinear upsample as one (Hx*Wx, H*W) matrix: x_up = (W_sq @ x) @ ut
    Rh = _bilinear_matrix(H, Hx)
    Rw = _bilinear_matrix(W, Wx)
    ut = jnp.kron(Rh, Rw).T.astype(f32)                      # (Hx*Wx, H*W)

    colp, matp = [], []
    for si, _ in enumerate(scales):
        ca = params['conv_a'][si]
        s1, sh1 = _bn_fold(ca['bn1'])
        s2, sh2 = _bn_fold(ca['bn2'])
        # cat([cov, cov]) has identical channels -> fold conv1 into a row-sum
        colp.append(jnp.stack([s1 * jnp.sum(ca['w1'], axis=1), sh1, sh2], axis=1))
        wf_si = (params['scale_weights'][si]
                 * params['w_fusion'][:, si * C:(si + 1) * C])
        matp.append(jnp.stack([s2[:, None] * ca['w2'], ca['w3'], wf_si], axis=0))
    colp = jnp.stack(colp, axis=0).astype(f32)               # (ns, C, 3)
    matp = jnp.stack(matp, axis=0).astype(f32)               # (ns, 3, C, C)

    # up_block 3x3 conv with BN folded, laid out for the im2col matmul
    su, shu = _bn_fold(params['bn_up'])
    wup = su[:, None, None, None] * params['w_up']           # (C, 2C, 3, 3)
    wup = wup.transpose(0, 2, 3, 1).reshape(C, -1).astype(f32)   # (C, 9*2C)

    bias = jnp.stack([params['b_sq'], params['b_fusion'],
                      su * params['b_up'] + shu], axis=1).astype(f32)  # (C, 3)

    invn = _inv_boxcount(H, W, C, scales).astype(f32)        # (ns, H*W)
    return dict(wsq=params['w_sq'].astype(f32), ut=ut, invn=invn,
                colp=colp, matp=matp, bias=bias, wup=wup)


# ---------------------------------------------------------------------------
# fused kernel: squeeze+upsample -> MSGF3 -> up_block   (one batch / grid step)
# ---------------------------------------------------------------------------

def _make_fused_kernel(C, W, HW, scales, pad):
    C2 = 2 * C
    smax = max(scales)
    f32 = jnp.float32
    c0 = pad  # lane offset of the image data inside the zero-padded shift buffer

    def kernel(x_ref, lat_ref, wsq_ref, ut_ref, invn_ref, colp_ref, matp_ref,
               bias_ref, wup_ref, o_ref, buf_ref, im_ref):
        bias = bias_ref[...]                                  # (C, 3)

        # column-validity masks (hoisted, built once from a 2-D iota)
        col = jax.lax.broadcasted_iota(jnp.int32, (1, HW), 1) % W
        masks = {}
        for d in range(-smax, smax + 1):
            if d != 0:
                masks[d] = ((col + d >= 0) & (col + d < W)).astype(f32)

        # ---- stage 1: squeeze (1x1 conv) + bilinear upsample (MXU) --------
        s = jnp.dot(wsq_ref[...], x_ref[0], preferred_element_type=f32)   # (C, Hx*Wx)
        x_up = jnp.dot(s, ut_ref[...], preferred_element_type=f32) + bias[:, 0:1]

        # ---- stage 2: fused MultiScaleConvGuidedFilter3 --------------------
        lat = lat_ref[0]                                      # (C, HW) slab
        cs = jnp.sum(lat, axis=0, keepdims=True)              # channel sum
        css = jnp.sum(lat * lat, axis=0, keepdims=True)       # channel sum of squares

        # in-kernel halo: zero the shift buffer once; pads stay zero afterwards
        buf_ref[...] = jnp.zeros(buf_ref.shape, f32)

        acc = None
        for si, srad in enumerate(scales):
            buf_ref[0:1, c0:c0 + HW] = cs
            buf_ref[1:2, c0:c0 + HW] = css
            # horizontal all-ones box pass (column masks kill row wrap-around)
            hsum = buf_ref[0:2, c0:c0 + HW]
            for dj in range(-srad, srad + 1):
                if dj != 0:
                    hsum = hsum + buf_ref[0:2, c0 + dj:c0 + dj + HW] * masks[dj]
            buf_ref[0:2, c0:c0 + HW] = hsum
            # vertical pass: shifted reads fall into the zeroed halo -> no masks
            vsum = buf_ref[0:2, c0:c0 + HW]
            for di in range(-srad, srad + 1):
                if di != 0:
                    off = di * W
                    vsum = vsum + buf_ref[0:2, c0 + off:c0 + off + HW]

            invn = invn_ref[si:si + 1, :]
            mean = vsum[0:1] * invn                           # mean_x (all channels equal)
            cov = vsum[1:2] * invn - mean * mean              # cov_xy

            # conv_a (1x1 convs, BN folded): rank-1 broadcast then MXU matmuls
            cp = colp_ref[si]                                 # (C, 3)
            h1 = jnp.maximum(cp[:, 0:1] * cov + cp[:, 1:2], 0.0)
            h2 = jnp.maximum(jnp.dot(matp_ref[si, 0], h1,
                                     preferred_element_type=f32) + cp[:, 2:3], 0.0)
            A = jnp.dot(matp_ref[si, 1], h2, preferred_element_type=f32)

            # y = A*x + (mean - A*mean); per-scale weight + conv_fusion folded
            y = A * lat + mean * (1.0 - A)
            contrib = jnp.dot(matp_ref[si, 2], y, preferred_element_type=f32)
            acc = contrib if acc is None else acc + contrib
        lat_f = jnp.maximum(acc + bias[:, 1:2], 0.0)          # (C, HW)

        # ---- stage 3: up_block 3x3 conv on cat([x_up, lat_f]) + BN + ReLU --
        buf_ref[0:C, c0:c0 + HW] = x_up                       # implicit channel concat
        buf_ref[C:C2, c0:c0 + HW] = lat_f
        for t in range(9):
            dy, dx = t // 3, t % 3
            off = (dy - 1) * W + (dx - 1)
            win = buf_ref[0:C2, c0 + off:c0 + off + HW]
            if dx != 1:
                win = win * masks[dx - 1]
            im_ref[t * C2:(t + 1) * C2, :] = win              # lane-dense im2col slab
        out = jnp.dot(wup_ref[...], im_ref[...], preferred_element_type=f32)
        o_ref[0] = jnp.maximum(out + bias[:, 2:3], 0.0)       # unmasked 256-lane store

    return kernel


# ---------------------------------------------------------------------------
# wrapper: full UpsampleBlock1.forward (one pallas_call, free reshapes only)
# ---------------------------------------------------------------------------

def upsample_block1_forward(x, lateral, packed, scales=(1, 2)):
    f32 = jnp.float32
    N, in_c, Hx, Wx = x.shape
    _, C, H, W = lateral.shape
    HW, HWx = H * W, Hx * Wx
    ns = len(scales)
    smax = max(scales)
    pad = max(smax * W, W + 1)
    C2 = 2 * C

    x2 = x.astype(f32).reshape(N, in_c, HWx)        # free NCHW reshapes, no pads
    lat2 = lateral.astype(f32).reshape(N, C, HW)

    out2 = pl.pallas_call(
        _make_fused_kernel(C, W, HW, scales, pad),
        out_shape=jax.ShapeDtypeStruct((N, C, HW), f32),
        grid_spec=pltpu.PrefetchScalarGridSpec(
            num_scalar_prefetch=0,
            grid=(N,),
            in_specs=[
                pl.BlockSpec((1, in_c, HWx), lambda n: (n, 0, 0)),
                pl.BlockSpec((1, C, HW), lambda n: (n, 0, 0)),
                pl.BlockSpec((C, in_c), lambda n: (0, 0)),
                pl.BlockSpec((HWx, HW), lambda n: (0, 0)),
                pl.BlockSpec((ns, HW), lambda n: (0, 0)),
                pl.BlockSpec((ns, C, 3), lambda n: (0, 0, 0)),
                pl.BlockSpec((ns, 3, C, C), lambda n: (0, 0, 0, 0)),
                pl.BlockSpec((C, 3), lambda n: (0, 0)),
                pl.BlockSpec((C, 9 * C2), lambda n: (0, 0)),
            ],
            out_specs=pl.BlockSpec((1, C, HW), lambda n: (n, 0, 0)),
            scratch_shapes=[
                pltpu.VMEM((C2, HW + 2 * pad), f32),   # zero-padded shift buffer
                pltpu.VMEM((9 * C2, HW), f32),         # im2col slab for the 3x3 conv
            ],
        ),
        compiler_params=pltpu.CompilerParams(
            dimension_semantics=("parallel",)),
    )(x2, lat2, packed['wsq'], packed['ut'], packed['invn'],
      packed['colp'], packed['matp'], packed['bias'], packed['wup'])
    return out2.reshape(N, C, H, W)


# ---------------------------------------------------------------------------
# reference (plain JAX, follows the PyTorch module structure op-for-op)
# ---------------------------------------------------------------------------

def _conv2d_ref(x, w, b=None, pad=0):
    y = jax.lax.conv_general_dilated(
        x, w, window_strides=(1, 1), padding=((pad, pad), (pad, pad)),
        dimension_numbers=('NCHW', 'OIHW', 'NCHW'),
        precision=jax.lax.Precision.HIGHEST)
    if b is not None:
        y = y + b[None, :, None, None]
    return y


def _bn_eval_ref(x, bn):
    g, b, m, v = bn
    return (x - m[None, :, None, None]) / jnp.sqrt(v[None, :, None, None] + _BN_EPS) \
        * g[None, :, None, None] + b[None, :, None, None]


def upsample_block1_ref(x, lateral, params, scales=(1, 2)):
    _, _, Hx, Wx = x.shape
    _, out_c, H, W = lateral.shape
    relu = lambda t: jnp.maximum(t, 0.0)
    hp = jax.lax.Precision.HIGHEST

    # squeeze + bilinear upsample (align_corners=False)
    s = _conv2d_ref(x, params['w_sq'][:, :, None, None], params['b_sq'])
    Rh = _bilinear_matrix(H, Hx)
    Rw = _bilinear_matrix(W, Wx)
    t = jnp.einsum('ncpq,jq->ncpj', s, Rw, precision=hp)
    x_up = jnp.einsum('ip,ncpj->ncij', Rh, t, precision=hp)

    # MultiScaleConvGuidedFilter3
    ys = []
    for si, sc in enumerate(scales):
        k = 2 * sc + 1
        ones_w = jnp.ones((out_c, out_c, k, k), jnp.float32)
        Nmap = _conv2d_ref(jnp.ones((1, out_c, H, W), jnp.float32), ones_w, pad=sc)
        mean_x = _conv2d_ref(lateral, ones_w, pad=sc) / Nmap
        cov = _conv2d_ref(lateral * lateral, ones_w, pad=sc) / Nmap - mean_x * mean_x
        fused = jnp.concatenate([cov, cov], axis=1)
        ca = params['conv_a'][si]
        h = relu(_bn_eval_ref(_conv2d_ref(fused, ca['w1'][:, :, None, None]), ca['bn1']))
        h = relu(_bn_eval_ref(_conv2d_ref(h, ca['w2'][:, :, None, None]), ca['bn2']))
        A = _conv2d_ref(h, ca['w3'][:, :, None, None])
        b = mean_x - A * mean_x
        # F.interpolate(A/b, (H, W)) is identity here (same size)
        ys.append(params['scale_weights'][si] * (A * lateral + b))
    comb = jnp.concatenate(ys, axis=1)
    lat_f = relu(_conv2d_ref(comb, params['w_fusion'][:, :, None, None],
                             params['b_fusion']))

    # up_block
    cat = jnp.concatenate([x_up, lat_f], axis=1)
    out = _conv2d_ref(cat, params['w_up'], params['b_up'], pad=1)
    return relu(_bn_eval_ref(out, params['bn_up']))


# ---------------------------------------------------------------------------
# synthetic parameters + main
# ---------------------------------------------------------------------------

def init_params(key, in_c, out_c, scales):
    keys = iter(jax.random.split(key, 32))
    f32 = jnp.float32

    def conv_w(k, co, ci, kh=1, kw=1):
        bound = 1.0 / math.sqrt(ci * kh * kw)
        shape = (co, ci) if kh == 1 and kw == 1 else (co, ci, kh, kw)
        return jax.random.uniform(k, shape, f32, -bound, bound)

    def bn_p(k):
        k1, k2, k3, k4 = jax.random.split(k, 4)
        return (jax.random.uniform(k1, (out_c,), f32, 0.8, 1.2),
                jax.random.uniform(k2, (out_c,), f32, -0.1, 0.1),
                jax.random.uniform(k3, (out_c,), f32, -0.1, 0.1),
                jax.random.uniform(k4, (out_c,), f32, 0.5, 1.5))

    p = {}
    p['w_sq'] = conv_w(next(keys), out_c, in_c)
    p['b_sq'] = jax.random.uniform(next(keys), (out_c,), f32,
                                   -1.0 / math.sqrt(in_c), 1.0 / math.sqrt(in_c))
    p['conv_a'] = []
    for _ in scales:
        p['conv_a'].append({
            'w1': conv_w(next(keys), out_c, 2 * out_c),
            'bn1': bn_p(next(keys)),
            'w2': conv_w(next(keys), out_c, out_c),
            'bn2': bn_p(next(keys)),
            'w3': conv_w(next(keys), out_c, out_c),
        })
    p['scale_weights'] = jax.random.uniform(next(keys), (len(scales),), f32, 0.5, 1.5)
    p['w_fusion'] = conv_w(next(keys), out_c, 2 * out_c)
    p['b_fusion'] = jax.random.uniform(next(keys), (out_c,), f32, -0.3, 0.3)
    p['w_up'] = conv_w(next(keys), out_c, 2 * out_c, 3, 3)
    p['b_up'] = jax.random.uniform(next(keys), (out_c,), f32, -0.1, 0.1)
    p['bn_up'] = bn_p(next(keys))
    return p


if __name__ == "__main__":
    key = jax.random.PRNGKey(0)
    kx, kl, kp = jax.random.split(key, 3)

    N = 2
    out_c = 4
    in_c = 2 * out_c          # module requires in_c == 2*out_c (cat([cov, cov]))
    Hx = Wx = 8               # low-res `x`
    H = W = 16                # `lateral` / output spatial size
    scales = (1, 2)

    x = jax.random.normal(kx, (N, in_c, Hx, Wx), dtype=jnp.float32)
    lateral = jax.random.normal(kl, (N, out_c, H, W), dtype=jnp.float32)
    params = init_params(kp, in_c, out_c, scales)

    # parameter folding / constants: built ONCE, outside the forward path
    packed = precompute_params(params, (Hx, Wx), (H, W), scales)
    packed = jax.block_until_ready(packed)

    fwd = jax.jit(upsample_block1_forward)
    y = jax.block_until_ready(fwd(x, lateral, packed))

    y_ref = upsample_block1_ref(x, lateral, params, scales)
    assert y.shape == (N, out_c, H, W), y.shape
    max_err = float(jnp.max(jnp.abs(y - y_ref)))
    assert jnp.allclose(y, y_ref, atol=2e-3, rtol=2e-3), max_err

    print("KERNEL_OK")
</pallas_src>

<mosaic_0001>
module attributes {stable_mosaic.version = 11 : i64} {
  func.func @kernel(%arg0: i32, %arg1: memref<1x8x64xf32, #tpu.memory_space<vmem>>, %arg2: memref<1x4x256xf32, #tpu.memory_space<vmem>>, %arg3: memref<4x8xf32, #tpu.memory_space<vmem>>, %arg4: memref<64x256xf32, #tpu.memory_space<vmem>>, %arg5: memref<2x256xf32, #tpu.memory_space<vmem>>, %arg6: memref<2x4x3xf32, #tpu.memory_space<vmem>>, %arg7: memref<2x3x4x4xf32, #tpu.memory_space<vmem>>, %arg8: memref<4x3xf32, #tpu.memory_space<vmem>>, %arg9: memref<4x72xf32, #tpu.memory_space<vmem>>, %arg10: memref<1x4x256xf32, #tpu.memory_space<vmem>>, %arg11: memref<8x320xf32, #tpu.memory_space<vmem>>, %arg12: memref<72x256xf32, #tpu.memory_space<vmem>>) attributes {dimension_semantics = [#tpu.dimension_semantics<parallel>], iteration_bounds = array<i64: 2>, scalar_prefetch = 0 : i64, scratch_operands = 2 : i64, tpu.core_type = #tpu.core_type<tc>, window_params = [{transform_indices = @transform_0, window_bounds = array<i64: 1, 8, 64>}, {transform_indices = @transform_1, window_bounds = array<i64: 1, 4, 256>}, {pipeline_mode = #tpu.pipeline_mode<synchronous>, transform_indices = @transform_2, window_bounds = array<i64: 4, 8>}, {pipeline_mode = #tpu.pipeline_mode<synchronous>, transform_indices = @transform_3, window_bounds = array<i64: 64, 256>}, {pipeline_mode = #tpu.pipeline_mode<synchronous>, transform_indices = @transform_4, window_bounds = array<i64: 2, 256>}, {pipeline_mode = #tpu.pipeline_mode<synchronous>, transform_indices = @transform_5, window_bounds = array<i64: 2, 4, 3>}, {pipeline_mode = #tpu.pipeline_mode<synchronous>, transform_indices = @transform_6, window_bounds = array<i64: 2, 3, 4, 4>}, {pipeline_mode = #tpu.pipeline_mode<synchronous>, transform_indices = @transform_7, window_bounds = array<i64: 4, 3>}, {pipeline_mode = #tpu.pipeline_mode<synchronous>, transform_indices = @transform_8, window_bounds = array<i64: 4, 72>}, {transform_indices = @transform_9, window_bounds = array<i64: 1, 4, 256>}]} {
    %c0 = arith.constant 0 : index
    %c0_0 = arith.constant 0 : index
    %0 = vector.load %arg8[%c0, %c0_0] : memref<4x3xf32, #tpu.memory_space<vmem>>, vector<4x3xf32>
    %1 = tpu.iota {dimensions = array<i32: 1>} : vector<1x256xi32>
    %c16_i32 = arith.constant 16 : i32
    %c0_i32 = arith.constant 0 : i32
    %2 = arith.cmpi eq, %c16_i32, %c0_i32 : i32
    %c1_i32 = arith.constant 1 : i32
    %3 = arith.select %2, %c1_i32, %c16_i32 : i32
    %4 = vector.broadcast %3 : i32 to vector<1x256xi32>
    %5 = arith.remsi %1, %4 : vector<1x256xi32>
    %c0_i32_1 = arith.constant 0 : i32
    %6 = vector.broadcast %c0_i32_1 : i32 to vector<1x256xi32>
    %7 = arith.cmpi ne, %5, %6 : vector<1x256xi32>
    %c0_i32_2 = arith.constant 0 : i32
    %8 = vector.broadcast %c0_i32_2 : i32 to vector<1x256xi32>
    %9 = arith.cmpi slt, %5, %8 : vector<1x256xi32>
    %c0_i32_3 = arith.constant 0 : i32
    %10 = arith.cmpi slt, %3, %c0_i32_3 : i32
    %11 = vector.broadcast %10 : i1 to vector<1x256xi1>
    %12 = vector.broadcast %11 : vector<1x256xi1> to vector<1x256xi1>
    %13 = arith.xori %9, %12 : vector<1x256xi1>
    %14 = arith.andi %13, %7 : vector<1x256xi1>
    %15 = vector.broadcast %3 : i32 to vector<1x256xi32>
    %16 = arith.addi %5, %15 : vector<1x256xi32>
    %17 = arith.select %14, %16, %5 : vector<1x256xi1>, vector<1x256xi32>
    %c-2_i32 = arith.constant -2 : i32
    %18 = vector.broadcast %c-2_i32 : i32 to vector<1x256xi32>
    %19 = arith.addi %17, %18 : vector<1x256xi32>
    %c0_i32_4 = arith.constant 0 : i32
    %20 = vector.broadcast %c0_i32_4 : i32 to vector<1x256xi32>
    %21 = arith.cmpi sge, %19, %20 : vector<1x256xi32>
    %c-2_i32_5 = arith.constant -2 : i32
    %22 = vector.broadcast %c-2_i32_5 : i32 to vector<1x256xi32>
    %23 = arith.addi %17, %22 : vector<1x256xi32>
    %c16_i32_6 = arith.constant 16 : i32
    %24 = vector.broadcast %c16_i32_6 : i32 to vector<1x256xi32>
    %25 = arith.cmpi slt, %23, %24 : vector<1x256xi32>
    %26 = arith.andi %21, %25 : vector<1x256xi1>
    %27 = arith.extui %26 : vector<1x256xi1> to vector<1x256xi32>
    %28 = arith.sitofp %27 : vector<1x256xi32> to vector<1x256xf32>
    %c-1_i32 = arith.constant -1 : i32
    %29 = vector.broadcast %c-1_i32 : i32 to vector<1x256xi32>
    %30 = arith.addi %17, %29 : vector<1x256xi32>
    %c0_i32_7 = arith.constant 0 : i32
    %31 = vector.broadcast %c0_i32_7 : i32 to vector<1x256xi32>
    %32 = arith.cmpi sge, %30, %31 : vector<1x256xi32>
    %c-1_i32_8 = arith.constant -1 : i32
    %33 = vector.broadcast %c-1_i32_8 : i32 to vector<1x256xi32>
    %34 = arith.addi %17, %33 : vector<1x256xi32>
    %c16_i32_9 = arith.constant 16 : i32
    %35 = vector.broadcast %c16_i32_9 : i32 to vector<1x256xi32>
    %36 = arith.cmpi slt, %34, %35 : vector<1x256xi32>
    %37 = arith.andi %32, %36 : vector<1x256xi1>
    %38 = arith.extui %37 : vector<1x256xi1> to vector<1x256xi32>
    %39 = arith.sitofp %38 : vector<1x256xi32> to vector<1x256xf32>
    %c1_i32_10 = arith.constant 1 : i32
    %40 = vector.broadcast %c1_i32_10 : i32 to vector<1x256xi32>
    %41 = arith.addi %17, %40 : vector<1x256xi32>
    %c0_i32_11 = arith.constant 0 : i32
    %42 = vector.broadcast %c0_i32_11 : i32 to vector<1x256xi32>
    %43 = arith.cmpi sge, %41, %42 : vector<1x256xi32>
    %c1_i32_12 = arith.constant 1 : i32
    %44 = vector.broadcast %c1_i32_12 : i32 to vector<1x256xi32>
    %45 = arith.addi %17, %44 : vector<1x256xi32>
    %c16_i32_13 = arith.constant 16 : i32
    %46 = vector.broadcast %c16_i32_13 : i32 to vector<1x256xi32>
    %47 = arith.cmpi slt, %45, %46 : vector<1x256xi32>
    %48 = arith.andi %43, %47 : vector<1x256xi1>
    %49 = arith.extui %48 : vector<1x256xi1> to vector<1x256xi32>
    %50 = arith.sitofp %49 : vector<1x256xi32> to vector<1x256xf32>
    %c2_i32 = arith.constant 2 : i32
    %51 = vector.broadcast %c2_i32 : i32 to vector<1x256xi32>
    %52 = arith.addi %17, %51 : vector<1x256xi32>
    %c0_i32_14 = arith.constant 0 : i32
    %53 = vector.broadcast %c0_i32_14 : i32 to vector<1x256xi32>
    %54 = arith.cmpi sge, %52, %53 : vector<1x256xi32>
    %c2_i32_15 = arith.constant 2 : i32
    %55 = vector.broadcast %c2_i32_15 : i32 to vector<1x256xi32>
    %56 = arith.addi %17, %55 : vector<1x256xi32>
    %c16_i32_16 = arith.constant 16 : i32
    %57 = vector.broadcast %c16_i32_16 : i32 to vector<1x256xi32>
    %58 = arith.cmpi slt, %56, %57 : vector<1x256xi32>
    %59 = arith.andi %54, %58 : vector<1x256xi1>
    %60 = arith.extui %59 : vector<1x256xi1> to vector<1x256xi32>
    %61 = arith.sitofp %60 : vector<1x256xi32> to vector<1x256xf32>
    %c0_17 = arith.constant 0 : index
    %c0_18 = arith.constant 0 : index
    %62 = vector.load %arg3[%c0_17, %c0_18] : memref<4x8xf32, #tpu.memory_space<vmem>>, vector<4x8xf32>
    %c0_19 = arith.constant 0 : index
    %c0_20 = arith.constant 0 : index
    %c0_21 = arith.constant 0 : index
    %63 = vector.load %arg1[%c0_19, %c0_20, %c0_21] : memref<1x8x64xf32, #tpu.memory_space<vmem>>, vector<1x8x64xf32>
    %64 = vector.shape_cast %63 : vector<1x8x64xf32> to vector<8x64xf32>
    %cst = arith.constant dense<0.000000e+00> : vector<4x64xf32>
    %65 = tpu.matmul %62, %64, %cst {dimension_numbers = #tpu.dot_dimension_numbers<[1], [0], [0], [1], [0, 0, 1, 1], [], []>} : vector<4x8xf32>, vector<8x64xf32>, vector<4x64xf32> -> vector<4x64xf32>
    %c0_22 = arith.constant 0 : index
    %c0_23 = arith.constant 0 : index
    %66 = vector.load %arg4[%c0_22, %c0_23] : memref<64x256xf32, #tpu.memory_space<vmem>>, vector<64x256xf32>
    %cst_24 = arith.constant dense<0.000000e+00> : vector<4x256xf32>
    %67 = tpu.matmul %65, %66, %cst_24 {dimension_numbers = #tpu.dot_dimension_numbers<[1], [0], [0], [1], [0, 0, 1, 1], [], []>} : vector<4x64xf32>, vector<64x256xf32>, vector<4x256xf32> -> vector<4x256xf32>
    %68 = vector.extract_strided_slice %0 {offsets = [0, 0], sizes = [4, 1], strides = [1, 1]} : vector<4x3xf32> to vector<4x1xf32>
    %69 = vector.broadcast %68 : vector<4x1xf32> to vector<4x256xf32>
    %70 = arith.addf %67, %69 : vector<4x256xf32>
    %c0_25 = arith.constant 0 : index
    %c0_26 = arith.constant 0 : index
    %c0_27 = arith.constant 0 : index
    %71 = vector.load %arg2[%c0_25, %c0_26, %c0_27] : memref<1x4x256xf32, #tpu.memory_space<vmem>>, vector<1x4x256xf32>
    %72 = vector.shape_cast %71 : vector<1x4x256xf32> to vector<4x256xf32>
    %cst_28 = arith.constant dense<0.000000e+00> : vector<256xf32>
    %73 = vector.multi_reduction <add>, %72, %cst_28 [0] : vector<4x256xf32> to vector<256xf32>
    %74 = vector.shape_cast %73 : vector<256xf32> to vector<1x256xf32>
    %75 = arith.mulf %72, %72 : vector<4x256xf32>
    %cst_29 = arith.constant dense<0.000000e+00> : vector<256xf32>
    %76 = vector.multi_reduction <add>, %75, %cst_29 [0] : vector<4x256xf32> to vector<256xf32>
    %77 = vector.shape_cast %76 : vector<256xf32> to vector<1x256xf32>
    %cst_30 = arith.constant 0.000000e+00 : f32
    %78 = vector.broadcast %cst_30 : f32 to vector<8x320xf32>
    %c0_31 = arith.constant 0 : index
    %c0_32 = arith.constant 0 : index
    %79 = vector.load %arg11[%c0_31, %c0_32] : memref<8x320xf32, #tpu.memory_space<vmem>>, vector<8x320xf32>
    tpu.vector_store %arg11[%c0_31, %c0_32], %78 {strides = array<i32>} : memref<8x320xf32, #tpu.memory_space<vmem>>, vector<8x320xf32>,
    %c0_33 = arith.constant 0 : index
    %c32 = arith.constant 32 : index
    %80 = vector.load %arg11[%c0_33, %c32] : memref<8x320xf32, #tpu.memory_space<vmem>>, vector<1x256xf32>
    tpu.vector_store %arg11[%c0_33, %c32], %74 {strides = array<i32>} : memref<8x320xf32, #tpu.memory_space<vmem>>, vector<1x256xf32>,
    %c1 = arith.constant 1 : index
    %c32_34 = arith.constant 32 : index
    %81 = vector.load %arg11[%c1, %c32_34] : memref<8x320xf32, #tpu.memory_space<vmem>>, vector<1x256xf32>
    tpu.vector_store %arg11[%c1, %c32_34], %77 {strides = array<i32>} : memref<8x320xf32, #tpu.memory_space<vmem>>, vector<1x256xf32>,
    %c0_35 = arith.constant 0 : index
    %c32_36 = arith.constant 32 : index
    %82 = vector.load %arg11[%c0_35, %c32_36] : memref<8x320xf32, #tpu.memory_space<vmem>>, vector<2x256xf32>
    %c0_37 = arith.constant 0 : index
    %c31 = arith.constant 31 : index
    %83 = vector.load %arg11[%c0_37, %c31] : memref<8x320xf32, #tpu.memory_space<vmem>>, vector<2x256xf32>
    %84 = vector.broadcast %39 : vector<1x256xf32> to vector<2x256xf32>
    %85 = arith.mulf %83, %84 : vector<2x256xf32>
    %86 = arith.addf %82, %85 : vector<2x256xf32>
    %c0_38 = arith.constant 0 : index
    %c33 = arith.constant 33 : index
    %87 = vector.load %arg11[%c0_38, %c33] : memref<8x320xf32, #tpu.memory_space<vmem>>, vector<2x256xf32>
    %88 = vector.broadcast %50 : vector<1x256xf32> to vector<2x256xf32>
    %89 = arith.mulf %87, %88 : vector<2x256xf32>
    %90 = arith.addf %86, %89 : vector<2x256xf32>
    %c0_39 = arith.constant 0 : index
    %c32_40 = arith.constant 32 : index
    %91 = vector.load %arg11[%c0_39, %c32_40] : memref<8x320xf32, #tpu.memory_space<vmem>>, vector<2x256xf32>
    tpu.vector_store %arg11[%c0_39, %c32_40], %90 {strides = array<i32>} : memref<8x320xf32, #tpu.memory_space<vmem>>, vector<2x256xf32>,
    %c0_41 = arith.constant 0 : index
    %c32_42 = arith.constant 32 : index
    %92 = vector.load %arg11[%c0_41, %c32_42] : memref<8x320xf32, #tpu.memory_space<vmem>>, vector<2x256xf32>
    %c0_43 = arith.constant 0 : index
    %c16 = arith.constant 16 : index
    %93 = vector.load %arg11[%c0_43, %c16] : memref<8x320xf32, #tpu.memory_space<vmem>>, vector<2x256xf32>
    %94 = arith.addf %92, %93 : vector<2x256xf32>
    %c0_44 = arith.constant 0 : index
    %c48 = arith.constant 48 : index
    %95 = vector.load %arg11[%c0_44, %c48] : memref<8x320xf32, #tpu.memory_space<vmem>>, vector<2x256xf32>
    %96 = arith.addf %94, %95 : vector<2x256xf32>
    %c0_45 = arith.constant 0 : index
    %c0_46 = arith.constant 0 : index
    %97 = vector.load %arg5[%c0_45, %c0_46] : memref<2x256xf32, #tpu.memory_space<vmem>>, vector<1x256xf32>
    %98 = vector.extract_strided_slice %96 {offsets = [0, 0], sizes = [1, 256], strides = [1, 1]} : vector<2x256xf32> to vector<1x256xf32>
    %99 = arith.mulf %98, %97 : vector<1x256xf32>
    %100 = vector.extract_strided_slice %96 {offsets = [1, 0], sizes = [1, 256], strides = [1, 1]} : vector<2x256xf32> to vector<1x256xf32>
    %101 = arith.mulf %100, %97 : vector<1x256xf32>
    %102 = arith.mulf %99, %99 : vector<1x256xf32>
    %103 = arith.subf %101, %102 : vector<1x256xf32>
    %c0_47 = arith.constant 0 : index
    %c0_48 = arith.constant 0 : index
    %c0_49 = arith.constant 0 : index
    %104 = vector.load %arg6[%c0_47, %c0_48, %c0_49] : memref<2x4x3xf32, #tpu.memory_space<vmem>>, vector<1x4x3xf32>
    %105 = vector.shape_cast %104 : vector<1x4x3xf32> to vector<4x3xf32>
    %106 = vector.extract_strided_slice %105 {offsets = [0, 0], sizes = [4, 1], strides = [1, 1]} : vector<4x3xf32> to vector<4x1xf32>
    %107 = vector.broadcast %106 : vector<4x1xf32> to vector<4x256xf32>
    %108 = vector.broadcast %103 : vector<1x256xf32> to vector<4x256xf32>
    %109 = arith.mulf %107, %108 : vector<4x256xf32>
    %110 = vector.extract_strided_slice %105 {offsets = [0, 1], sizes = [4, 1], strides = [1, 1]} : vector<4x3xf32> to vector<4x1xf32>
    %111 = vector.broadcast %110 : vector<4x1xf32> to vector<4x256xf32>
    %112 = arith.addf %109, %111 : vector<4x256xf32>
    %cst_50 = arith.constant 0.000000e+00 : f32
    %113 = vector.broadcast %cst_50 : f32 to vector<4x256xf32>
    %114 = arith.maximumf %112, %113 : vector<4x256xf32>
    %c0_51 = arith.constant 0 : index
    %c0_52 = arith.constant 0 : index
    %c0_53 = arith.constant 0 : index
    %c0_54 = arith.constant 0 : index
    %115 = vector.load %arg7[%c0_51, %c0_52, %c0_53, %c0_54] : memref<2x3x4x4xf32, #tpu.memory_space<vmem>>, vector<1x1x4x4xf32>
    %116 = vector.shape_cast %115 : vector<1x1x4x4xf32> to vector<4x4xf32>
    %cst_55 = arith.constant dense<0.000000e+00> : vector<4x256xf32>
    %117 = tpu.matmul %116, %114, %cst_55 {dimension_numbers = #tpu.dot_dimension_numbers<[1], [0], [0], [1], [0, 0, 1, 1], [], []>} : vector<4x4xf32>, vector<4x256xf32>, vector<4x256xf32> -> vector<4x256xf32>
    %118 = vector.extract_strided_slice %105 {offsets = [0, 2], sizes = [4, 1], strides = [1, 1]} : vector<4x3xf32> to vector<4x1xf32>
    %119 = vector.broadcast %118 : vector<4x1xf32> to vector<4x256xf32>
    %120 = arith.addf %117, %119 : vector<4x256xf32>
    %cst_56 = arith.constant 0.000000e+00 : f32
    %121 = vector.broadcast %cst_56 : f32 to vector<4x256xf32>
    %122 = arith.maximumf %120, %121 : vector<4x256xf32>
    %c0_57 = arith.constant 0 : index
    %c1_58 = arith.constant 1 : index
    %c0_59 = arith.constant 0 : index
    %c0_60 = arith.constant 0 : index
    %123 = vector.load %arg7[%c0_57, %c1_58, %c0_59, %c0_60] : memref<2x3x4x4xf32, #tpu.memory_space<vmem>>, vector<1x1x4x4xf32>
    %124 = vector.shape_cast %123 : vector<1x1x4x4xf32> to vector<4x4xf32>
    %cst_61 = arith.constant dense<0.000000e+00> : vector<4x256xf32>
    %125 = tpu.matmul %124, %122, %cst_61 {dimension_numbers = #tpu.dot_dimension_numbers<[1], [0], [0], [1], [0, 0, 1, 1], [], []>} : vector<4x4xf32>, vector<4x256xf32>, vector<4x256xf32> -> vector<4x256xf32>
    %126 = arith.mulf %125, %72 : vector<4x256xf32>
    %cst_62 = arith.constant 1.000000e+00 : f32
    %127 = vector.broadcast %cst_62 : f32 to vector<4x256xf32>
    %128 = arith.subf %127, %125 : vector<4x256xf32>
    %129 = vector.broadcast %99 : vector<1x256xf32> to vector<4x256xf32>
    %130 = arith.mulf %129, %128 : vector<4x256xf32>
    %131 = arith.addf %126, %130 : vector<4x256xf32>
    %c0_63 = arith.constant 0 : index
    %c2 = arith.constant 2 : index
    %c0_64 = arith.constant 0 : index
    %c0_65 = arith.constant 0 : index
    %132 = vector.load %arg7[%c0_63, %c2, %c0_64, %c0_65] : memref<2x3x4x4xf32, #tpu.memory_space<vmem>>, vector<1x1x4x4xf32>
    %133 = vector.shape_cast %132 : vector<1x1x4x4xf32> to vector<4x4xf32>
    %cst_66 = arith.constant dense<0.000000e+00> : vector<4x256xf32>
    %134 = tpu.matmul %133, %131, %cst_66 {dimension_numbers = #tpu.dot_dimension_numbers<[1], [0], [0], [1], [0, 0, 1, 1], [], []>} : vector<4x4xf32>, vector<4x256xf32>, vector<4x256xf32> -> vector<4x256xf32>
    %c0_67 = arith.constant 0 : index
    %c32_68 = arith.constant 32 : index
    %135 = vector.load %arg11[%c0_67, %c32_68] : memref<8x320xf32, #tpu.memory_space<vmem>>, vector<1x256xf32>
    tpu.vector_store %arg11[%c0_67, %c32_68], %74 {strides = array<i32>} : memref<8x320xf32, #tpu.memory_space<vmem>>, vector<1x256xf32>,
    %c1_69 = arith.constant 1 : index
    %c32_70 = arith.constant 32 : index
    %136 = vector.load %arg11[%c1_69, %c32_70] : memref<8x320xf32, #tpu.memory_space<vmem>>, vector<1x256xf32>
    tpu.vector_store %arg11[%c1_69, %c32_70], %77 {strides = array<i32>} : memref<8x320xf32, #tpu.memory_space<vmem>>, vector<1x256xf32>,
    %c0_71 = arith.constant 0 : index
    %c32_72 = arith.constant 32 : index
    %137 = vector.load %arg11[%c0_71, %c32_72] : memref<8x320xf32, #tpu.memory_space<vmem>>, vector<2x256xf32>
    %c0_73 = arith.constant 0 : index
    %c30 = arith.constant 30 : index
    %138 = vector.load %arg11[%c0_73, %c30] : memref<8x320xf32, #tpu.memory_space<vmem>>, vector<2x256xf32>
    %139 = vector.broadcast %28 : vector<1x256xf32> to vector<2x256xf32>
    %140 = arith.mulf %138, %139 : vector<2x256xf32>
    %141 = arith.addf %137, %140 : vector<2x256xf32>
    %c0_74 = arith.constant 0 : index
    %c31_75 = arith.constant 31 : index
    %142 = vector.load %arg11[%c0_74, %c31_75] : memref<8x320xf32, #tpu.memory_space<vmem>>, vector<2x256xf32>
    %143 = vector.broadcast %39 : vector<1x256xf32> to vector<2x256xf32>
    %144 = arith.mulf %142, %143 : vector<2x256xf32>
    %145 = arith.addf %141, %144 : vector<2x256xf32>
    %c0_76 = arith.constant 0 : index
    %c33_77 = arith.constant 33 : index
    %146 = vector.load %arg11[%c0_76, %c33_77] : memref<8x320xf32, #tpu.memory_space<vmem>>, vector<2x256xf32>
    %147 = vector.broadcast %50 : vector<1x256xf32> to vector<2x256xf32>
    %148 = arith.mulf %146, %147 : vector<2x256xf32>
    %149 = arith.addf %145, %148 : vector<2x256xf32>
    %c0_78 = arith.constant 0 : index
    %c34 = arith.constant 34 : index
    %150 = vector.load %arg11[%c0_78, %c34] : memref<8x320xf32, #tpu.memory_space<vmem>>, vector<2x256xf32>
    %151 = vector.broadcast %61 : vector<1x256xf32> to vector<2x256xf32>
    %152 = arith.mulf %150, %151 : vector<2x256xf32>
    %153 = arith.addf %149, %152 : vector<2x256xf32>
    %c0_79 = arith.constant 0 : index
    %c32_80 = arith.constant 32 : index
    %154 = vector.load %arg11[%c0_79, %c32_80] : memref<8x320xf32, #tpu.memory_space<vmem>>, vector<2x256xf32>
    tpu.vector_store %arg11[%c0_79, %c32_80], %153 {strides = array<i32>} : memref<8x320xf32, #tpu.memory_space<vmem>>, vector<2x256xf32>,
    %c0_81 = arith.constant 0 : index
    %c32_82 = arith.constant 32 : index
    %155 = vector.load %arg11[%c0_81, %c32_82] : memref<8x320xf32, #tpu.memory_space<vmem>>, vector<2x256xf32>
    %c0_83 = arith.constant 0 : index
    %c0_84 = arith.constant 0 : index
    %156 = vector.load %arg11[%c0_83, %c0_84] : memref<8x320xf32, #tpu.memory_space<vmem>>, vector<2x256xf32>
    %157 = arith.addf %155, %156 : vector<2x256xf32>
    %c0_85 = arith.constant 0 : index
    %c16_86 = arith.constant 16 : index
    %158 = vector.load %arg11[%c0_85, %c16_86] : memref<8x320xf32, #tpu.memory_space<vmem>>, vector<2x256xf32>
    %159 = arith.addf %157, %158 : vector<2x256xf32>
    %c0_87 = arith.constant 0 : index
    %c48_88 = arith.constant 48 : index
    %160 = vector.load %arg11[%c0_87, %c48_88] : memref<8x320xf32, #tpu.memory_space<vmem>>, vector<2x256xf32>
    %161 = arith.addf %159, %160 : vector<2x256xf32>
    %c0_89 = arith.constant 0 : index
    %c64 = arith.constant 64 : index
    %162 = vector.load %arg11[%c0_89, %c64] : memref<8x320xf32, #tpu.memory_space<vmem>>, vector<2x256xf32>
    %163 = arith.addf %161, %162 : vector<2x256xf32>
    %c1_90 = arith.constant 1 : index
    %c0_91 = arith.constant 0 : index
    %164 = vector.load %arg5[%c1_90, %c0_91] : memref<2x256xf32, #tpu.memory_space<vmem>>, vector<1x256xf32>
    %165 = vector.extract_strided_slice %163 {offsets = [0, 0], sizes = [1, 256], strides = [1, 1]} : vector<2x256xf32> to vector<1x256xf32>
    %166 = arith.mulf %165, %164 : vector<1x256xf32>
    %167 = vector.extract_strided_slice %163 {offsets = [1, 0], sizes = [1, 256], strides = [1, 1]} : vector<2x256xf32> to vector<1x256xf32>
    %168 = arith.mulf %167, %164 : vector<1x256xf32>
    %169 = arith.mulf %166, %166 : vector<1x256xf32>
    %170 = arith.subf %168, %169 : vector<1x256xf32>
    %c1_92 = arith.constant 1 : index
    %c0_93 = arith.constant 0 : index
    %c0_94 = arith.constant 0 : index
    %171 = vector.load %arg6[%c1_92, %c0_93, %c0_94] : memref<2x4x3xf32, #tpu.memory_space<vmem>>, vector<1x4x3xf32>
    %172 = vector.shape_cast %171 : vector<1x4x3xf32> to vector<4x3xf32>
    %173 = vector.extract_strided_slice %172 {offsets = [0, 0], sizes = [4, 1], strides = [1, 1]} : vector<4x3xf32> to vector<4x1xf32>
    %174 = vector.broadcast %173 : vector<4x1xf32> to vector<4x256xf32>
    %175 = vector.broadcast %170 : vector<1x256xf32> to vector<4x256xf32>
    %176 = arith.mulf %174, %175 : vector<4x256xf32>
    %177 = vector.extract_strided_slice %172 {offsets = [0, 1], sizes = [4, 1], strides = [1, 1]} : vector<4x3xf32> to vector<4x1xf32>
    %178 = vector.broadcast %177 : vector<4x1xf32> to vector<4x256xf32>
    %179 = arith.addf %176, %178 : vector<4x256xf32>
    %cst_95 = arith.constant 0.000000e+00 : f32
    %180 = vector.broadcast %cst_95 : f32 to vector<4x256xf32>
    %181 = arith.maximumf %179, %180 : vector<4x256xf32>
    %c1_96 = arith.constant 1 : index
    %c0_97 = arith.constant 0 : index
    %c0_98 = arith.constant 0 : index
    %c0_99 = arith.constant 0 : index
    %182 = vector.load %arg7[%c1_96, %c0_97, %c0_98, %c0_99] : memref<2x3x4x4xf32, #tpu.memory_space<vmem>>, vector<1x1x4x4xf32>
    %183 = vector.shape_cast %182 : vector<1x1x4x4xf32> to vector<4x4xf32>
    %cst_100 = arith.constant dense<0.000000e+00> : vector<4x256xf32>
    %184 = tpu.matmul %183, %181, %cst_100 {dimension_numbers = #tpu.dot_dimension_numbers<[1], [0], [0], [1], [0, 0, 1, 1], [], []>} : vector<4x4xf32>, vector<4x256xf32>, vector<4x256xf32> -> vector<4x256xf32>
    %185 = vector.extract_strided_slice %172 {offsets = [0, 2], sizes = [4, 1], strides = [1, 1]} : vector<4x3xf32> to vector<4x1xf32>
    %186 = vector.broadcast %185 : vector<4x1xf32> to vector<4x256xf32>
    %187 = arith.addf %184, %186 : vector<4x256xf32>
    %cst_101 = arith.constant 0.000000e+00 : f32
    %188 = vector.broadcast %cst_101 : f32 to vector<4x256xf32>
    %189 = arith.maximumf %187, %188 : vector<4x256xf32>
    %c1_102 = arith.constant 1 : index
    %c1_103 = arith.constant 1 : index
    %c0_104 = arith.constant 0 : index
    %c0_105 = arith.constant 0 : index
    %190 = vector.load %arg7[%c1_102, %c1_103, %c0_104, %c0_105] : memref<2x3x4x4xf32, #tpu.memory_space<vmem>>, vector<1x1x4x4xf32>
    %191 = vector.shape_cast %190 : vector<1x1x4x4xf32> to vector<4x4xf32>
    %cst_106 = arith.constant dense<0.000000e+00> : vector<4x256xf32>
    %192 = tpu.matmul %191, %189, %cst_106 {dimension_numbers = #tpu.dot_dimension_numbers<[1], [0], [0], [1], [0, 0, 1, 1], [], []>} : vector<4x4xf32>, vector<4x256xf32>, vector<4x256xf32> -> vector<4x256xf32>
    %193 = arith.mulf %192, %72 : vector<4x256xf32>
    %cst_107 = arith.constant 1.000000e+00 : f32
    %194 = vector.broadcast %cst_107 : f32 to vector<4x256xf32>
    %195 = arith.subf %194, %192 : vector<4x256xf32>
    %196 = vector.broadcast %166 : vector<1x256xf32> to vector<4x256xf32>
    %197 = arith.mulf %196, %195 : vector<4x256xf32>
    %198 = arith.addf %193, %197 : vector<4x256xf32>
    %c1_108 = arith.constant 1 : index
    %c2_109 = arith.constant 2 : index
    %c0_110 = arith.constant 0 : index
    %c0_111 = arith.constant 0 : index
    %199 = vector.load %arg7[%c1_108, %c2_109, %c0_110, %c0_111] : memref<2x3x4x4xf32, #tpu.memory_space<vmem>>, vector<1x1x4x4xf32>
    %200 = vector.shape_cast %199 : vector<1x1x4x4xf32> to vector<4x4xf32>
    %cst_112 = arith.constant dense<0.000000e+00> : vector<4x256xf32>
    %201 = tpu.matmul %200, %198, %cst_112 {dimension_numbers = #tpu.dot_dimension_numbers<[1], [0], [0], [1], [0, 0, 1, 1], [], []>} : vector<4x4xf32>, vector<4x256xf32>, vector<4x256xf32> -> vector<4x256xf32>
    %202 = arith.addf %134, %201 : vector<4x256xf32>
    %203 = vector.extract_strided_slice %0 {offsets = [0, 1], sizes = [4, 1], strides = [1, 1]} : vector<4x3xf32> to vector<4x1xf32>
    %204 = vector.broadcast %203 : vector<4x1xf32> to vector<4x256xf32>
    %205 = arith.addf %202, %204 : vector<4x256xf32>
    %cst_113 = arith.constant 0.000000e+00 : f32
    %206 = vector.broadcast %cst_113 : f32 to vector<4x256xf32>
    %207 = arith.maximumf %205, %206 : vector<4x256xf32>
    %c0_114 = arith.constant 0 : index
    %c32_115 = arith.constant 32 : index
    %208 = vector.load %arg11[%c0_114, %c32_115] : memref<8x320xf32, #tpu.memory_space<vmem>>, vector<4x256xf32>
    tpu.vector_store %arg11[%c0_114, %c32_115], %70 {strides = array<i32>} : memref<8x320xf32, #tpu.memory_space<vmem>>, vector<4x256xf32>,
    %c4 = arith.constant 4 : index
    %c32_116 = arith.constant 32 : index
    %209 = vector.load %arg11[%c4, %c32_116] : memref<8x320xf32, #tpu.memory_space<vmem>>, vector<4x256xf32>
    tpu.vector_store %arg11[%c4, %c32_116], %207 {strides = array<i32>} : memref<8x320xf32, #tpu.memory_space<vmem>>, vector<4x256xf32>,
    %c0_117 = arith.constant 0 : index
    %c15 = arith.constant 15 : index
    %210 = vector.load %arg11[%c0_117, %c15] : memref<8x320xf32, #tpu.memory_space<vmem>>, vector<8x256xf32>
    %211 = vector.broadcast %39 : vector<1x256xf32> to vector<8x256xf32>
    %212 = arith.mulf %210, %211 : vector<8x256xf32>
    %c0_118 = arith.constant 0 : index
    %c0_119 = arith.constant 0 : index
    %213 = vector.load %arg12[%c0_118, %c0_119] : memref<72x256xf32, #tpu.memory_space<vmem>>, vector<8x256xf32>
    tpu.vector_store %arg12[%c0_118, %c0_119], %212 {strides = array<i32>} : memref<72x256xf32, #tpu.memory_space<vmem>>, vector<8x256xf32>,
    %c0_120 = arith.constant 0 : index
    %c16_121 = arith.constant 16 : index
    %214 = vector.load %arg11[%c0_120, %c16_121] : memref<8x320xf32, #tpu.memory_space<vmem>>, vector<8x256xf32>
    %c8 = arith.constant 8 : index
    %c0_122 = arith.constant 0 : index
    %215 = vector.load %arg12[%c8, %c0_122] : memref<72x256xf32, #tpu.memory_space<vmem>>, vector<8x256xf32>
    tpu.vector_store %arg12[%c8, %c0_122], %214 {strides = array<i32>} : memref<72x256xf32, #tpu.memory_space<vmem>>, vector<8x256xf32>,
    %c0_123 = arith.constant 0 : index
    %c17 = arith.constant 17 : index
    %216 = vector.load %arg11[%c0_123, %c17] : memref<8x320xf32, #tpu.memory_space<vmem>>, vector<8x256xf32>
    %217 = vector.broadcast %50 : vector<1x256xf32> to vector<8x256xf32>
    %218 = arith.mulf %216, %217 : vector<8x256xf32>
    %c16_124 = arith.constant 16 : index
    %c0_125 = arith.constant 0 : index
    %219 = vector.load %arg12[%c16_124, %c0_125] : memref<72x256xf32, #tpu.memory_space<vmem>>, vector<8x256xf32>
    tpu.vector_store %arg12[%c16_124, %c0_125], %218 {strides = array<i32>} : memref<72x256xf32, #tpu.memory_space<vmem>>, vector<8x256xf32>,
    %c0_126 = arith.constant 0 : index
    %c31_127 = arith.constant 31 : index
    %220 = vector.load %arg11[%c0_126, %c31_127] : memref<8x320xf32, #tpu.memory_space<vmem>>, vector<8x256xf32>
    %221 = vector.broadcast %39 : vector<1x256xf32> to vector<8x256xf32>
    %222 = arith.mulf %220, %221 : vector<8x256xf32>
    %c24 = arith.constant 24 : index
    %c0_128 = arith.constant 0 : index
    %223 = vector.load %arg12[%c24, %c0_128] : memref<72x256xf32, #tpu.memory_space<vmem>>, vector<8x256xf32>
    tpu.vector_store %arg12[%c24, %c0_128], %222 {strides = array<i32>} : memref<72x256xf32, #tpu.memory_space<vmem>>, vector<8x256xf32>,
    %c0_129 = arith.constant 0 : index
    %c32_130 = arith.constant 32 : index
    %224 = vector.load %arg11[%c0_129, %c32_130] : memref<8x320xf32, #tpu.memory_space<vmem>>, vector<8x256xf32>
    %c32_131 = arith.constant 32 : index
    %c0_132 = arith.constant 0 : index
    %225 = vector.load %arg12[%c32_131, %c0_132] : memref<72x256xf32, #tpu.memory_space<vmem>>, vector<8x256xf32>
    tpu.vector_store %arg12[%c32_131, %c0_132], %224 {strides = array<i32>} : memref<72x256xf32, #tpu.memory_space<vmem>>, vector<8x256xf32>,
    %c0_133 = arith.constant 0 : index
    %c33_134 = arith.constant 33 : index
    %226 = vector.load %arg11[%c0_133, %c33_134] : memref<8x320xf32, #tpu.memory_space<vmem>>, vector<8x256xf32>
    %227 = vector.broadcast %50 : vector<1x256xf32> to vector<8x256xf32>
    %228 = arith.mulf %226, %227 : vector<8x256xf32>
    %c40 = arith.constant 40 : index
    %c0_135 = arith.constant 0 : index
    %229 = vector.load %arg12[%c40, %c0_135] : memref<72x256xf32, #tpu.memory_space<vmem>>, vector<8x256xf32>
    tpu.vector_store %arg12[%c40, %c0_135], %228 {strides = array<i32>} : memref<72x256xf32, #tpu.memory_space<vmem>>, vector<8x256xf32>,
    %c0_136 = arith.constant 0 : index
    %c47 = arith.constant 47 : index
    %230 = vector.load %arg11[%c0_136, %c47] : memref<8x320xf32, #tpu.memory_space<vmem>>, vector<8x256xf32>
    %231 = vector.broadcast %39 : vector<1x256xf32> to vector<8x256xf32>
    %232 = arith.mulf %230, %231 : vector<8x256xf32>
    %c48_137 = arith.constant 48 : index
    %c0_138 = arith.constant 0 : index
    %233 = vector.load %arg12[%c48_137, %c0_138] : memref<72x256xf32, #tpu.memory_space<vmem>>, vector<8x256xf32>
    tpu.vector_store %arg12[%c48_137, %c0_138], %232 {strides = array<i32>} : memref<72x256xf32, #tpu.memory_space<vmem>>, vector<8x256xf32>,
    %c0_139 = arith.constant 0 : index
    %c48_140 = arith.constant 48 : index
    %234 = vector.load %arg11[%c0_139, %c48_140] : memref<8x320xf32, #tpu.memory_space<vmem>>, vector<8x256xf32>
    %c56 = arith.constant 56 : index
    %c0_141 = arith.constant 0 : index
    %235 = vector.load %arg12[%c56, %c0_141] : memref<72x256xf32, #tpu.memory_space<vmem>>, vector<8x256xf32>
    tpu.vector_store %arg12[%c56, %c0_141], %234 {strides = array<i32>} : memref<72x256xf32, #tpu.memory_space<vmem>>, vector<8x256xf32>,
    %c0_142 = arith.constant 0 : index
    %c49 = arith.constant 49 : index
    %236 = vector.load %arg11[%c0_142, %c49] : memref<8x320xf32, #tpu.memory_space<vmem>>, vector<8x256xf32>
    %237 = vector.broadcast %50 : vector<1x256xf32> to vector<8x256xf32>
    %238 = arith.mulf %236, %237 : vector<8x256xf32>
    %c64_143 = arith.constant 64 : index
    %c0_144 = arith.constant 0 : index
    %239 = vector.load %arg12[%c64_143, %c0_144] : memref<72x256xf32, #tpu.memory_space<vmem>>, vector<8x256xf32>
    tpu.vector_store %arg12[%c64_143, %c0_144], %238 {strides = array<i32>} : memref<72x256xf32, #tpu.memory_space<vmem>>, vector<8x256xf32>,
    %c0_145 = arith.constant 0 : index
    %c0_146 = arith.constant 0 : index
    %240 = vector.load %arg9[%c0_145, %c0_146] : memref<4x72xf32, #tpu.memory_space<vmem>>, vector<4x72xf32>
    %c0_147 = arith.constant 0 : index
    %c0_148 = arith.constant 0 : index
    %241 = vector.load %arg12[%c0_147, %c0_148] : memref<72x256xf32, #tpu.memory_space<vmem>>, vector<72x256xf32>
    %cst_149 = arith.constant dense<0.000000e+00> : vector<4x256xf32>
    %242 = tpu.matmul %240, %241, %cst_149 {dimension_numbers = #tpu.dot_dimension_numbers<[1], [0], [0], [1], [0, 0, 1, 1], [], []>} : vector<4x72xf32>, vector<72x256xf32>, vector<4x256xf32> -> vector<4x256xf32>
    %243 = vector.extract_strided_slice %0 {offsets = [0, 2], sizes = [4, 1], strides = [1, 1]} : vector<4x3xf32> to vector<4x1xf32>
    %244 = vector.broadcast %243 : vector<4x1xf32> to vector<4x256xf32>
    %245 = arith.addf %242, %244 : vector<4x256xf32>
    %cst_150 = arith.constant 0.000000e+00 : f32
    %246 = vector.broadcast %cst_150 : f32 to vector<4x256xf32>
    %247 = arith.maximumf %245, %246 : vector<4x256xf32>
    %c0_151 = arith.constant 0 : index
    %c0_152 = arith.constant 0 : index
    %c0_153 = arith.constant 0 : index
    %248 = vector.load %arg10[%c0_151, %c0_152, %c0_153] : memref<1x4x256xf32, #tpu.memory_space<vmem>>, vector<1x4x256xf32>
    %249 = vector.shape_cast %248 : vector<1x4x256xf32> to vector<4x256xf32>
    %250 = vector.shape_cast %247 : vector<4x256xf32> to vector<1x4x256xf32>
    tpu.vector_store %arg10[%c0_151, %c0_152, %c0_153], %250 {strides = array<i32>} : memref<1x4x256xf32, #tpu.memory_space<vmem>>, vector<1x4x256xf32>,
    return
  }
  func.func @transform_0(%arg0: i32) -> (i32, i32, i32) {
    %c0_i32 = arith.constant 0 : i32
    %c0_i32_0 = arith.constant 0 : i32
    %c0_i32_1 = arith.constant 0 : i32
    return %arg0, %c0_i32, %c0_i32_0 : i32, i32, i32
  }
  func.func @transform_1(%arg0: i32) -> (i32, i32, i32) {
    %c0_i32 = arith.constant 0 : i32
    %c0_i32_0 = arith.constant 0 : i32
    %c0_i32_1 = arith.constant 0 : i32
    return %arg0, %c0_i32, %c0_i32_0 : i32, i32, i32
  }
  func.func @transform_2(%arg0: i32) -> (i32, i32) {
    %c0_i32 = arith.constant 0 : i32
    %c0_i32_0 = arith.constant 0 : i32
    %c0_i32_1 = arith.constant 0 : i32
    return %c0_i32, %c0_i32_0 : i32, i32
  }
  func.func @transform_3(%arg0: i32) -> (i32, i32) {
    %c0_i32 = arith.constant 0 : i32
    %c0_i32_0 = arith.constant 0 : i32
    %c0_i32_1 = arith.constant 0 : i32
    return %c0_i32, %c0_i32_0 : i32, i32
  }
  func.func @transform_4(%arg0: i32) -> (i32, i32) {
    %c0_i32 = arith.constant 0 : i32
    %c0_i32_0 = arith.constant 0 : i32
    %c0_i32_1 = arith.constant 0 : i32
    return %c0_i32, %c0_i32_0 : i32, i32
  }
  func.func @transform_5(%arg0: i32) -> (i32, i32, i32) {
    %c0_i32 = arith.constant 0 : i32
    %c0_i32_0 = arith.constant 0 : i32
    %c0_i32_1 = arith.constant 0 : i32
    %c0_i32_2 = arith.constant 0 : i32
    return %c0_i32, %c0_i32_0, %c0_i32_1 : i32, i32, i32
  }
  func.func @transform_6(%arg0: i32) -> (i32, i32, i32, i32) {
    %c0_i32 = arith.constant 0 : i32
    %c0_i32_0 = arith.constant 0 : i32
    %c0_i32_1 = arith.constant 0 : i32
    %c0_i32_2 = arith.constant 0 : i32
    %c0_i32_3 = arith.constant 0 : i32
    return %c0_i32, %c0_i32_0, %c0_i32_1, %c0_i32_2 : i32, i32, i32, i32
  }
  func.func @transform_7(%arg0: i32) -> (i32, i32) {
    %c0_i32 = arith.constant 0 : i32
    %c0_i32_0 = arith.constant 0 : i32
    %c0_i32_1 = arith.constant 0 : i32
    return %c0_i32, %c0_i32_0 : i32, i32
  }
  func.func @transform_8(%arg0: i32) -> (i32, i32) {
    %c0_i32 = arith.constant 0 : i32
    %c0_i32_0 = arith.constant 0 : i32
    %c0_i32_1 = arith.constant 0 : i32
    return %c0_i32, %c0_i32_0 : i32, i32
  }
  func.func @transform_9(%arg0: i32) -> (i32, i32, i32) {
    %c0_i32 = arith.constant 0 : i32
    %c0_i32_0 = arith.constant 0 : i32
    %c0_i32_1 = arith.constant 0 : i32
    return %arg0, %c0_i32, %c0_i32_0 : i32, i32, i32
  }
}

</mosaic_0001>

<llo_original>
// kernel: upsample_block1_forward.1
$region0: #{upsample_block1_forward.1}
  #allocation0 [shape = 'u32[]', space=smem, size = 0x4, offset = 0x4, fixed_abs, tag = 'smem constant byte address 0x4 - core index']
  #allocation1 [shape = 'u32[144,128]{1,0:T(1,128)}', space=vmem, size = 0x12000, scoped, tag = 'internal scratch']
  #allocation2 [shape = 'f32[8,320]{1,0:T(8,128)}', space=vmem, size = 0x3000, scoped, tag = 'scratch operand']
  #allocation3 [shape = 'f32[72,256]{1,0:T(8,128)}', space=vmem, size = 0x12000, scoped, tag = 'scratch operand']
  %s0 = inlined_call_operand.vmem [shape: f32[2,8,64], index: 0, kind: input, shape index: {}]
  %s1 = inlined_call_operand.vmem [shape: f32[2,4,256], index: 1, kind: input, shape index: {}]
  %s2 = inlined_call_operand.vmem [shape: f32[4,8], index: 2, kind: input, shape index: {}]
  %s3 = inlined_call_operand.vmem [shape: f32[64,256], index: 3, kind: input, shape index: {}]
  %s4 = inlined_call_operand.vmem [shape: f32[2,256], index: 4, kind: input, shape index: {}]
  %s5 = inlined_call_operand.vmem [shape: f32[2,4,3], index: 5, kind: input, shape index: {}]
  %s6 = inlined_call_operand.vmem [shape: f32[2,3,4,4], index: 6, kind: input, shape index: {}]
  %s7 = inlined_call_operand.vmem [shape: f32[4,3], index: 7, kind: input, shape index: {}]
  %s8 = inlined_call_operand.vmem [shape: f32[4,72], index: 8, kind: input, shape index: {}]
  %s9 = inlined_call_operand.vmem [shape: f32[2,4,256], index: 9, kind: output, shape index: {}]
  %s10 = sld [smem:[#allocation0]]
  $region69: #{upsample_block1_forward.1} parent=0
    _
  %s12 = ssub.s32 1, %s10
  %s13 = scalar_select 0, %s12, %s10
  loop: start=0, step=1, limit=4
  $region2: #{upsample_block1_forward.1} parent=0 // loop_pre_header
    _
  $region3: #{upsample_block1_forward.1} parent=0 // loop_header
    %s15 = sphi 0, %s19
    %p16 = scmp.ge.s32.totalorder %s15, 4
    %s25 = sphi 0, %s27
    %s28 = sphi 0, %s25
    %s29 = sphi 0, %s28
    %s45 = sphi 0, %s29
    %s51 = sphi 0, %s53
    %s54 = sphi 0, %s51
    %s55 = sphi 0, %s54
    %s71 = sphi 0, %s55
    %s75 = sphi 0, %s75
    %s77 = sphi 0, %s75
    %s78 = sphi 0, %s77
    %s92 = sphi 0, %s78
    %s96 = sphi 0, %s96
    %s98 = sphi 0, %s96
    %s99 = sphi 0, %s98
    %s113 = sphi 0, %s99
    %s117 = sphi 0, %s117
    %s119 = sphi 0, %s117
    %s120 = sphi 0, %s119
    %s134 = sphi 0, %s120
    %s138 = sphi 0, %s138
    %s140 = sphi 0, %s138
    %s141 = sphi 0, %s140
    %s155 = sphi 0, %s141
    %s159 = sphi 0, %s159
    %s161 = sphi 0, %s159
    %s162 = sphi 0, %s161
    %s176 = sphi 0, %s162
    %s180 = sphi 0, %s180
    %s182 = sphi 0, %s180
    %s183 = sphi 0, %s182
    %s197 = sphi 0, %s183
    %s201 = sphi 0, %s201
    %s203 = sphi 0, %s201
    %s204 = sphi 0, %s203
    %s218 = sphi 0, %s204
    %s224 = sphi 0, %s226
    %s227 = sphi 0, %s224
    %s228 = sphi 0, %s227
    %s244 = sphi 0, %s228
  $region4: #{upsample_block1_forward.1} parent=0 // loop_header_branch
    %18 = sbr.rel (%p16) target = $region8
  $region5: #{upsample_block1_forward.1} parent=0 // loop_body
    %s20 = ssub.s32 %s15, 1
    %s21 = ssub.s32 %s15, 2
    %s22 = sadd.s32 %s15, 1
    %s23 = ssub.s32 %s15, %s22
    %p24 = scmp.eq.s32.totalorder %s23, 0
    %s26 = sadd.s32 %s25, 1
    %s27 = scalar_select %p24, %s25, %s26
    %p30 = pneg %p24
    %p31 = scmp.eq.s32.totalorder %s15, 1
    %p32 = por %p30, %p31
    %p33 = scmp.ne.s32.totalorder %s25, %s28
    %p34 = scmp.eq.s32.totalorder %s15, 0
    %p35 = por %p33, %p34
    %p36 = scmp.ne.s32.totalorder %s25, %s28
    %p37 = scmp.eq.s32.totalorder %s20, 1
    %p38 = por %p36, %p37
    %p39 = scmp.ne.s32.totalorder %s28, %s29
    %p40 = scmp.eq.s32.totalorder %s20, 0
    %p41 = por %p39, %p40
    %p42 = scmp.ne.s32.totalorder %s28, %s29
    %p43 = scmp.eq.s32.totalorder %s21, 1
    %p44 = por %p42, %p43
    %p46 = scmp.ne.s32.totalorder %s29, %s45
    %p47 = scmp.eq.s32.totalorder %s21, 0
    %p48 = por %p46, %p47
    %s49 = ssub.s32 %s15, %s22
    %p50 = scmp.eq.s32.totalorder %s49, 0
    %s52 = sadd.s32 %s51, 1
    %s53 = scalar_select %p50, %s51, %s52
    %p56 = pneg %p50
    %p57 = scmp.eq.s32.totalorder %s15, 1
    %p58 = por %p56, %p57
    %p59 = scmp.ne.s32.totalorder %s51, %s54
    %p60 = scmp.eq.s32.totalorder %s15, 0
    %p61 = por %p59, %p60
    %p62 = scmp.ne.s32.totalorder %s51, %s54
    %p63 = scmp.eq.s32.totalorder %s20, 1
    %p64 = por %p62, %p63
    %p65 = scmp.ne.s32.totalorder %s54, %s55
    %p66 = scmp.eq.s32.totalorder %s20, 0
    %p67 = por %p65, %p66
    %p68 = scmp.ne.s32.totalorder %s54, %s55
    %p69 = scmp.eq.s32.totalorder %s21, 1
    %p70 = por %p68, %p69
    %p72 = scmp.ne.s32.totalorder %s55, %s71
    %p73 = scmp.eq.s32.totalorder %s21, 0
    %p74 = por %p72, %p73
    %s76 = sadd.s32 %s75, 1
    %p79 = scmp.eq.s32.totalorder %s15, 1
    %p80 = scmp.ne.s32.totalorder %s75, %s77
    %p81 = scmp.eq.s32.totalorder %s15, 0
    %p82 = por %p80, %p81
    %p83 = scmp.ne.s32.totalorder %s75, %s77
    %p84 = scmp.eq.s32.totalorder %s20, 1
    %p85 = por %p83, %p84
    %p86 = scmp.ne.s32.totalorder %s77, %s78
    %p87 = scmp.eq.s32.totalorder %s20, 0
    %p88 = por %p86, %p87
    %p89 = scmp.ne.s32.totalorder %s77, %s78
    %p90 = scmp.eq.s32.totalorder %s21, 1
    %p91 = por %p89, %p90
    %p93 = scmp.ne.s32.totalorder %s78, %s92
    %p94 = scmp.eq.s32.totalorder %s21, 0
    %p95 = por %p93, %p94
    %s97 = sadd.s32 %s96, 1
    %p100 = scmp.eq.s32.totalorder %s15, 1
    %p101 = scmp.ne.s32.totalorder %s96, %s98
    %p102 = scmp.eq.s32.totalorder %s15, 0
    %p103 = por %p101, %p102
    %p104 = scmp.ne.s32.totalorder %s96, %s98
    %p105 = scmp.eq.s32.totalorder %s20, 1
    %p106 = por %p104, %p105
    %p107 = scmp.ne.s32.totalorder %s98, %s99
    %p108 = scmp.eq.s32.totalorder %s20, 0
    %p109 = por %p107, %p108
    %p110 = scmp.ne.s32.totalorder %s98, %s99
    %p111 = scmp.eq.s32.totalorder %s21, 1
    %p112 = por %p110, %p111
    %p114 = scmp.ne.s32.totalorder %s99, %s113
    %p115 = scmp.eq.s32.totalorder %s21, 0
    %p116 = por %p114, %p115
    %s118 = sadd.s32 %s117, 1
    %p121 = scmp.eq.s32.totalorder %s15, 1
    %p122 = scmp.ne.s32.totalorder %s117, %s119
    %p123 = scmp.eq.s32.totalorder %s15, 0
    %p124 = por %p122, %p123
    %p125 = scmp.ne.s32.totalorder %s117, %s119
    %p126 = scmp.eq.s32.totalorder %s20, 1
    %p127 = por %p125, %p126
    %p128 = scmp.ne.s32.totalorder %s119, %s120
    %p129 = scmp.eq.s32.totalorder %s20, 0
    %p130 = por %p128, %p129
    %p131 = scmp.ne.s32.totalorder %s119, %s120
    %p132 = scmp.eq.s32.totalorder %s21, 1
    %p133 = por %p131, %p132
    %p135 = scmp.ne.s32.totalorder %s120, %s134
    %p136 = scmp.eq.s32.totalorder %s21, 0
    %p137 = por %p135, %p136
    %s139 = sadd.s32 %s138, 1
    %p142 = scmp.eq.s32.totalorder %s15, 1
    %p143 = scmp.ne.s32.totalorder %s138, %s140
    %p144 = scmp.eq.s32.totalorder %s15, 0
    %p145 = por %p143, %p144
    %p146 = scmp.ne.s32.totalorder %s138, %s140
    %p147 = scmp.eq.s32.totalorder %s20, 1
    %p148 = por %p146, %p147
    %p149 = scmp.ne.s32.totalorder %s140, %s141
    %p150 = scmp.eq.s32.totalorder %s20, 0
    %p151 = por %p149, %p150
    %p152 = scmp.ne.s32.totalorder %s140, %s141
    %p153 = scmp.eq.s32.totalorder %s21, 1
    %p154 = por %p152, %p153
    %p156 = scmp.ne.s32.totalorder %s141, %s155
    %p157 = scmp.eq.s32.totalorder %s21, 0
    %p158 = por %p156, %p157
    %s160 = sadd.s32 %s159, 1
    %p163 = scmp.eq.s32.totalorder %s15, 1
    %p164 = scmp.ne.s32.totalorder %s159, %s161
    %p165 = scmp.eq.s32.totalorder %s15, 0
    %p166 = por %p164, %p165
    %p167 = scmp.ne.s32.totalorder %s159, %s161
    %p168 = scmp.eq.s32.totalorder %s20, 1
    %p169 = por %p167, %p168
    %p170 = scmp.ne.s32.totalorder %s161, %s162
    %p171 = scmp.eq.s32.totalorder %s20, 0
    %p172 = por %p170, %p171
    %p173 = scmp.ne.s32.totalorder %s161, %s162
    %p174 = scmp.eq.s32.totalorder %s21, 1
    %p175 = por %p173, %p174
    %p177 = scmp.ne.s32.totalorder %s162, %s176
    %p178 = scmp.eq.s32.totalorder %s21, 0
    %p179 = por %p177, %p178
    %s181 = sadd.s32 %s180, 1
    %p184 = scmp.eq.s32.totalorder %s15, 1
    %p185 = scmp.ne.s32.totalorder %s180, %s182
    %p186 = scmp.eq.s32.totalorder %s15, 0
    %p187 = por %p185, %p186
    %p188 = scmp.ne.s32.totalorder %s180, %s182
    %p189 = scmp.eq.s32.totalorder %s20, 1
    %p190 = por %p188, %p189
    %p191 = scmp.ne.s32.totalorder %s182, %s183
    %p192 = scmp.eq.s32.totalorder %s20, 0
    %p193 = por %p191, %p192
    %p194 = scmp.ne.s32.totalorder %s182, %s183
    %p195 = scmp.eq.s32.totalorder %s21, 1
    %p196 = por %p194, %p195
    %p198 = scmp.ne.s32.totalorder %s183, %s197
    %p199 = scmp.eq.s32.totalorder %s21, 0
    %p200 = por %p198, %p199
    %s202 = sadd.s32 %s201, 1
    %p205 = scmp.eq.s32.totalorder %s15, 1
    %p206 = scmp.ne.s32.totalorder %s201, %s203
    %p207 = scmp.eq.s32.totalorder %s15, 0
    %p208 = por %p206, %p207
    %p209 = scmp.ne.s32.totalorder %s201, %s203
    %p210 = scmp.eq.s32.totalorder %s20, 1
    %p211 = por %p209, %p210
    %p212 = scmp.ne.s32.totalorder %s203, %s204
    %p213 = scmp.eq.s32.totalorder %s20, 0
    %p214 = por %p212, %p213
    %p215 = scmp.ne.s32.totalorder %s203, %s204
    %p216 = scmp.eq.s32.totalorder %s21, 1
    %p217 = por %p215, %p216
    %p219 = scmp.ne.s32.totalorder %s204, %s218
    %p220 = scmp.eq.s32.totalorder %s21, 0
    %p221 = por %p219, %p220
    %s222 = ssub.s32 %s15, %s22
    %p223 = scmp.eq.s32.totalorder %s222, 0
    %s225 = sadd.s32 %s224, 1
    %s226 = scalar_select %p223, %s224, %s225
    %p229 = pneg %p223
    %p230 = scmp.eq.s32.totalorder %s15, 1
    %p231 = por %p229, %p230
    %p232 = scmp.ne.s32.totalorder %s224, %s227
    %p233 = scmp.eq.s32.totalorder %s15, 0
    %p234 = por %p232, %p233
    %p235 = scmp.ne.s32.totalorder %s224, %s227
    %p236 = scmp.eq.s32.totalorder %s20, 1
    %p237 = por %p235, %p236
    %p238 = scmp.ne.s32.totalorder %s227, %s228
    %p239 = scmp.eq.s32.totalorder %s20, 0
    %p240 = por %p238, %p239
    %p241 = scmp.ne.s32.totalorder %s227, %s228
    %p242 = scmp.eq.s32.totalorder %s21, 1
    %p243 = por %p241, %p242
    %p245 = scmp.ne.s32.totalorder %s228, %s244
    %p246 = scmp.eq.s32.totalorder %s21, 0
    %p247 = por %p245, %p246
    %p248 = scmp.le.s32.totalorder 1, %s15
    %p249 = scmp.lt.s32.totalorder %s15, 3
    %p250 = pnand %p248, %p249
    %p251 = pneg %p250
    // Predicated region
    $region9: #{upsample_block1_forward.1} parent=5 // pred_check
      _
    $region10: #{upsample_block1_forward.1} parent=5 // pred_check_branch
      %253 = sbr.rel (%p250) target = $region12
    $region11: #{upsample_block1_forward.1} parent=5 // pred_region
      %s254 = ssub.s32 %s15, 1
      // Predicated region
      $region13: #{upsample_block1_forward.1} parent=11 // pred_check
        %p255 = pneg %p88
      $region14: #{upsample_block1_forward.1} parent=11 // pred_check_branch
        %257 = sbr.rel (%p255) target = $region16
      $region15: #{upsample_block1_forward.1} parent=11 // pred_region
        _
      $region16: #{upsample_block1_forward.1} parent=11 // pred_fallthru
        _
      // Predicated region
      $region17: #{upsample_block1_forward.1} parent=11 // pred_check
        %p258 = pneg %p109
      $region18: #{upsample_block1_forward.1} parent=11 // pred_check_branch
        %260 = sbr.rel (%p258) target = $region20
      $region19: #{upsample_block1_forward.1} parent=11 // pred_region
        _
      $region20: #{upsample_block1_forward.1} parent=11 // pred_fallthru
        _
      // Predicated region
      $region21: #{upsample_block1_forward.1} parent=11 // pred_check
        %p261 = pneg %p130
      $region22: #{upsample_block1_forward.1} parent=11 // pred_check_branch
        %263 = sbr.rel (%p261) target = $region24
      $region23: #{upsample_block1_forward.1} parent=11 // pred_region
        _
      $region24: #{upsample_block1_forward.1} parent=11 // pred_fallthru
        _
      // Predicated region
      $region25: #{upsample_block1_forward.1} parent=11 // pred_check
        %p264 = pneg %p151
      $region26: #{upsample_block1_forward.1} parent=11 // pred_check_branch
        %266 = sbr.rel (%p264) target = $region28
      $region27: #{upsample_block1_forward.1} parent=11 // pred_region
        _
      $region28: #{upsample_block1_forward.1} parent=11 // pred_fallthru
        _
      // Predicated region
      $region29: #{upsample_block1_forward.1} parent=11 // pred_check
        %p267 = pneg %p172
      $region30: #{upsample_block1_forward.1} parent=11 // pred_check_branch
        %269 = sbr.rel (%p267) target = $region32
      $region31: #{upsample_block1_forward.1} parent=11 // pred_region
        _
      $region32: #{upsample_block1_forward.1} parent=11 // pred_fallthru
        _
      // Predicated region
      $region33: #{upsample_block1_forward.1} parent=11 // pred_check
        %p270 = pneg %p193
      $region34: #{upsample_block1_forward.1} parent=11 // pred_check_branch
        %272 = sbr.rel (%p270) target = $region36
      $region35: #{upsample_block1_forward.1} parent=11 // pred_region
        _
      $region36: #{upsample_block1_forward.1} parent=11 // pred_fallthru
        _
      // Predicated region
      $region37: #{upsample_block1_forward.1} parent=11 // pred_check
        %p273 = pneg %p214
      $region38: #{upsample_block1_forward.1} parent=11 // pred_check_branch
        %275 = sbr.rel (%p273) target = $region40
      $region39: #{upsample_block1_forward.1} parent=11 // pred_region
        _
      $region40: #{upsample_block1_forward.1} parent=11 // pred_fallthru
        _
    $region12: #{upsample_block1_forward.1} parent=5 // pred_fallthru
      _
    %p276 = scmp.lt.s32.totalorder %s15, 2
    // Predicated region
    $region41: #{upsample_block1_forward.1} parent=5 // pred_check
      %p277 = pneg %p276
    $region42: #{upsample_block1_forward.1} parent=5 // pred_check_branch
      %279 = sbr.rel (%p277) target = $region44
    $region43: #{upsample_block1_forward.1} parent=5 // pred_region
      // Predicated region
      $region45: #{upsample_block1_forward.1} parent=43 // pred_check
        %p280 = pneg %p35
      $region46: #{upsample_block1_forward.1} parent=43 // pred_check_branch
        %282 = sbr.rel (%p280) target = $region48
      $region47: #{upsample_block1_forward.1} parent=43 // pred_region
        %p283 = scmp.lt.s32.totalorder %s15, 1
        %s284 = scalar_select %p283, %s15, 1
        %s285 = smul.addr %s284, 8
        %s286 = scalar_lea.vmem %s0, %s285
      $region48: #{upsample_block1_forward.1} parent=43 // pred_fallthru
        _
      // Predicated region
      $region49: #{upsample_block1_forward.1} parent=43 // pred_check
        %p287 = pneg %p61
      $region50: #{upsample_block1_forward.1} parent=43 // pred_check_branch
        %289 = sbr.rel (%p287) target = $region52
      $region51: #{upsample_block1_forward.1} parent=43 // pred_region
        %p290 = scmp.lt.s32.totalorder %s15, 1
        %s291 = scalar_select %p290, %s15, 1
        %s292 = smul.addr %s291, 2
        %s293 = smul.addr %s292, 4
        %s294 = scalar_lea.vmem %s1, %s293
      $region52: #{upsample_block1_forward.1} parent=43 // pred_fallthru
        _
    $region44: #{upsample_block1_forward.1} parent=5 // pred_fallthru
      _
    %p295 = scmp.le.s32.totalorder 1, %s15
    %p296 = scmp.lt.s32.totalorder %s15, 3
    %p297 = pnand %p295, %p296
    %p298 = pneg %p297
    // Predicated region
    $region53: #{upsample_block1_forward.1} parent=5 // pred_check
      _
    $region54: #{upsample_block1_forward.1} parent=5 // pred_check_branch
      %300 = sbr.rel (%p297) target = $region56
    $region55: #{upsample_block1_forward.1} parent=5 // pred_region
      %s301 = ssub.s32 %s15, 1
      %p302 = scmp.lt.s32.totalorder %s20, 1
      %s303 = scalar_select %p302, %s20, 1
      %s304 = smul.addr %s303, 8
      %s305 = scalar_lea.vmem %s0, %s304
      %p306 = pneg %p41
      %p307 = pneg %p38
      %p308 = scmp.lt.s32.totalorder %s20, 1
      %s309 = scalar_select %p308, %s20, 1
      %s310 = smul.addr %s309, 2
      %s311 = smul.addr %s310, 4
      %s312 = scalar_lea.vmem %s1, %s311
      %p313 = pneg %p67
      %p314 = pneg %p64
      %p315 = pneg %p88
      %p316 = pneg %p85
      %p317 = pneg %p109
      %p318 = pneg %p106
      %p319 = pneg %p130
      %p320 = pneg %p127
      %p321 = pneg %p151
      %p322 = pneg %p148
      %p323 = pneg %p172
      %p324 = pneg %p169
      %p325 = pneg %p193
      %p326 = pneg %p190
      %p327 = pneg %p214
      %p328 = pneg %p211
      %p329 = pneg %p240
      %p330 = pneg %p237
      %p331 = scmp.lt.s32.totalorder %s20, 1
      %s332 = scalar_select %p331, %s20, 1
      %s333 = smul.addr %s332, 2
      %s334 = smul.addr %s333, 4
      %s335 = scalar_lea.vmem %s9, %s334
      %p336 = scmp.lt.s32.totalorder %s20, 1
      %s337 = scalar_select %p336, %s20, 1
      %s338 = smul.addr %s337, 8
      %s339 = scalar_lea.vmem %s0, %s338
      %p340 = scmp.lt.s32.totalorder %s20, 1
      %s341 = scalar_select %p340, %s20, 1
      %s342 = smul.addr %s341, 2
      %s343 = smul.addr %s342, 4
      %s344 = scalar_lea.vmem %s1, %s343
      %p345 = scmp.lt.s32.totalorder %s20, 1
      %s346 = scalar_select %p345, %s20, 1
      %s347 = smul.addr %s346, 2
      %s348 = smul.addr %s347, 4
      %s349 = scalar_lea.vmem %s9, %s348
      %v350 = vld [vmem:[%s7] sm:$0xf]
      %v351 = vlaneseq
      %v352 = vand.u32 %v351, 127
      %v353 = vadd.s32 %v352, 128
      %vm354 = vcmp.lt.s32.totalorder %v352, 0
      %v355 = vsub.s32 0, %v352
      %v356 = vsel %vm354, %v355, %v352
      %v357 = vshrl.u32 %v356, 4
      %v358 = vand.u32 %v356, 15
      %v359 = vsub.s32 0, %v358
      %v360 = vsel %vm354, %v359, %v358
      %vm361 = vcmp.lt.s32.totalorder %v353, 0
      %v362 = vsub.s32 0, %v353
      %v363 = vsel %vm361, %v362, %v353
      %v364 = vshrl.u32 %v363, 4
      %v365 = vand.u32 %v363, 15
      %v366 = vsub.s32 0, %v365
      %v367 = vsel %vm361, %v366, %v365
      %vm368 = vcmp.ne.s32.totalorder %v360, 0
      %vm369 = vcmp.ne.s32.totalorder %v367, 0
      %vm370 = vcmp.lt.s32.totalorder %v360, 0
      %vm371 = vcmp.lt.s32.totalorder %v367, 0
      %vm372 = vmand %vm370, %vm368
      %vm373 = vmand %vm371, %vm369
      %v374 = vadd.s32 %v360, 16
      %v375 = vadd.s32 %v367, 16
      %v376 = vsel %vm372, %v374, %v360
      %v377 = vsel %vm373, %v375, %v367
      %v378 = vadd.s32 %v376, 4294967294
      %v379 = vadd.s32 %v377, 4294967294
      %vm380 = vcmp.ge.s32.totalorder %v378, 0
      %vm381 = vcmp.ge.s32.totalorder %v379, 0
      %vm382 = vcmp.lt.s32.totalorder %v378, 16
      %vm383 = vcmp.lt.s32.totalorder %v379, 16
      %vm384 = vmand %vm380, %vm382
      %vm385 = vmand %vm381, %vm383
      %v386 = vsel %vm384, 1, 0
      %v387 = vsel %vm385, 1, 0
      %v388 = vcvt.s32.f32 %v386
      %v389 = vcvt.s32.f32 %v387
      %v390 = vadd.s32 %v376, 4294967295
      %v391 = vadd.s32 %v377, 4294967295
      %vm392 = vcmp.ge.s32.totalorder %v390, 0
      %vm393 = vcmp.ge.s32.totalorder %v391, 0
      %vm394 = vcmp.lt.s32.totalorder %v390, 16
      %vm395 = vcmp.lt.s32.totalorder %v391, 16
      %vm396 = vmand %vm392, %vm394
      %vm397 = vmand %vm393, %vm395
      %v398 = vsel %vm396, 1, 0
      %v399 = vsel %vm397, 1, 0
      %v400 = vcvt.s32.f32 %v398
      %v401 = vcvt.s32.f32 %v399
      %v402 = vadd.s32 %v376, 1
      %v403 = vadd.s32 %v377, 1
      %vm404 = vcmp.ge.s32.totalorder %v402, 0
      %vm405 = vcmp.ge.s32.totalorder %v403, 0
      %vm406 = vcmp.lt.s32.totalorder %v402, 16
      %vm407 = vcmp.lt.s32.totalorder %v403, 16
      %vm408 = vmand %vm404, %vm406
      %vm409 = vmand %vm405, %vm407
      %v410 = vsel %vm408, 1, 0
      %v411 = vsel %vm409, 1, 0
      %v412 = vcvt.s32.f32 %v410
      %v413 = vcvt.s32.f32 %v411
      %v414 = vadd.s32 %v376, 2
      %v415 = vadd.s32 %v377, 2
      %vm416 = vcmp.ge.s32.totalorder %v414, 0
      %vm417 = vcmp.ge.s32.totalorder %v415, 0
      %vm418 = vcmp.lt.s32.totalorder %v414, 16
      %vm419 = vcmp.lt.s32.totalorder %v415, 16
      %vm420 = vmand %vm416, %vm418
      %vm421 = vmand %vm417, %vm419
      %v422 = vsel %vm420, 1, 0
      %v423 = vsel %vm421, 1, 0
      %v424 = vcvt.s32.f32 %v422
      %v425 = vcvt.s32.f32 %v423
      %v426 = vld [vmem:[%s2] sm:$0xf]
      %v427 = vld [vmem:[%s339] sm:$0xff]
      %vm428 = vcmask 64512
      %v430 = vsel %vm428, %v426, 0
      %432 = vmatprep.subr.mxu0 0.0
      %433 = vmatpush1.msra.mxu0 %v427
      %434 = vmatprep.subr.mxu0 0.0
      %435 = vmatpush1.msra.mxu0 0.0
      %436 = vmatprep.subr.mxu0 0.0
      %437 = vmatpush1.msra.mxu0 0.0
      %438 = vmatprep.subr.mxu0 0.0
      %439 = vmatpush1.msra.mxu0 0.0
      %440 = vmatprep.subr.mxu0 0.0
      %441 = vmatpush1.msra.mxu0 0.0
      %442 = vmatprep.subr.mxu0 0.0
      %443 = vmatpush1.msra.mxu0 0.0
      %444 = vmatprep.subr.mxu0 0.0
      %445 = vmatpush1.msra.mxu0 0.0
      %446 = vmatprep.subr.mxu0 0.0
      %447 = vmatpush1.msra.mxu0 0.0
      %448 = vmatprep.subr.mxu0 0.0
      %449 = vmatpush1.msra.mxu0 0.0
      %450 = vmatprep.subr.mxu0 0.0
      %451 = vmatpush1.msra.mxu0 0.0
      %452 = vmatprep.subr.mxu0 0.0
      %453 = vmatpush1.msra.mxu0 0.0
      %454 = vmatprep.subr.mxu0 0.0
      %455 = vmatpush1.msra.mxu0 0.0
      %456 = vmatprep.subr.mxu0 0.0
      %457 = vmatpush1.msra.mxu0 0.0
      %458 = vmatprep.subr.mxu0 0.0
      %459 = vmatpush1.msra.mxu0 0.0
      %460 = vmatprep.subr.mxu0 0.0
      %461 = vmatpush1.msra.mxu0 0.0
      %462 = vmatprep.subr.mxu0 0.0
      %463 = vmatpush1.msra.mxu0 0.0
      %464 = vmatprep.subr.mxu0 0.0
      %465 = vmatpush1.msra.mxu0 0.0
      %466 = vmatprep.subr.mxu0 0.0
      %467 = vmatpush1.msra.mxu0 0.0
      %468 = vmatprep.subr.mxu0 0.0
      %469 = vmatpush1.msra.mxu0 0.0
      %470 = vmatprep.subr.mxu0 0.0
      %471 = vmatpush1.msra.mxu0 0.0
      %472 = vmatprep.subr.mxu0 0.0
      %473 = vmatpush1.msra.mxu0 0.0
      %474 = vmatprep.subr.mxu0 0.0
      %475 = vmatpush1.msra.mxu0 0.0
      %476 = vmatprep.subr.mxu0 0.0
      %477 = vmatpush1.msra.mxu0 0.0
      %478 = vmatprep.subr.mxu0 0.0
      %479 = vmatpush1.msra.mxu0 0.0
      %480 = vmatprep.subr.mxu0 0.0
      %481 = vmatpush1.msra.mxu0 0.0
      %482 = vmatprep.subr.mxu0 0.0
      %483 = vmatpush1.msra.mxu0 0.0
      %484 = vmatprep.subr.mxu0 0.0
      %485 = vmatpush1.msra.mxu0 0.0
      %486 = vmatprep.subr.mxu0 0.0
      %487 = vmatpush1.msra.mxu0 0.0
      %488 = vmatprep.subr.mxu0 0.0
      %489 = vmatpush1.msra.mxu0 0.0
      %490 = vmatprep.subr.mxu0 0.0
      %491 = vmatpush1.msra.mxu0 0.0
      %492 = vmatprep.subr.mxu0 0.0
      %493 = vmatpush1.msra.mxu0 0.0
      %494 = vmatprep.subr.mxu0 0.0
      %495 = vmatpush1.msra.mxu0 0.0
      %496 = vmatprep.mubr.f32.mxu0 0.0
      %497 = vmatmul.mubr.f32.gmra.mrb[0].mxu0 %v430
      %v498 = vpop.f32.mrb[0].mxu0
      %v499 = vadd.f32 0.0, %v498
      %v500 = vpop.f32.mrb[0].mxu0
      %501 = vdwg.mxu0
      %v502 = vld [vmem:[%s3] sm:$0xff]
      %v503 = vld [vmem:[%s3 + $0x8] sm:$0xff]
      %v504 = vld [vmem:[%s3 + $0x10] sm:$0xff]
      %v505 = vld [vmem:[%s3 + $0x18] sm:$0xff]
      %v506 = vld [vmem:[%s3 + $0x20] sm:$0xff]
      %v507 = vld [vmem:[%s3 + $0x28] sm:$0xff]
      %v508 = vld [vmem:[%s3 + $0x30] sm:$0xff]
      %v509 = vld [vmem:[%s3 + $0x38] sm:$0xff]
      %v510 = vld [vmem:[%s3 + $0x40] sm:$0xff]
      %v511 = vld [vmem:[%s3 + $0x48] sm:$0xff]
      %v512 = vld [vmem:[%s3 + $0x50] sm:$0xff]
      %v513 = vld [vmem:[%s3 + $0x58] sm:$0xff]
      %v514 = vld [vmem:[%s3 + $0x60] sm:$0xff]
      %v515 = vld [vmem:[%s3 + $0x68] sm:$0xff]
      %v516 = vld [vmem:[%s3 + $0x70] sm:$0xff]
      %v517 = vld [vmem:[%s3 + $0x78] sm:$0xff]
      %519 = vset.pattern.permute.xlu0 0
      %520 = vperm.xlu0 %519, %v350
      %v521 = vpop.permute.xlu0 %520
      %vm523 = vcmask 523264
      %v525 = vsel %vm523, %v499, 0
      %527 = vmatprep.subr.mxu0 %v503
      %528 = vmatpush1.msra.mxu0 %v502
      %529 = vmatprep.subr.mxu0 %v505
      %530 = vmatpush1.msra.mxu0 %v504
      %531 = vmatprep.subr.mxu0 %v507
      %532 = vmatpush1.msra.mxu0 %v506
      %533 = vmatprep.subr.mxu0 %v509
      %534 = vmatpush1.msra.mxu0 %v508
      %535 = vmatprep.subr.mxu0 %v511
      %536 = vmatpush1.msra.mxu0 %v510
      %537 = vmatprep.subr.mxu0 %v513
      %538 = vmatpush1.msra.mxu0 %v512
      %539 = vmatprep.subr.mxu0 %v515
      %540 = vmatpush1.msra.mxu0 %v514
      %541 = vmatprep.subr.mxu0 %v517
      %542 = vmatpush1.msra.mxu0 %v516
      %543 = vmatprep.subr.mxu0 0.0
      %544 = vmatpush1.msra.mxu0 0.0
      %545 = vmatprep.subr.mxu0 0.0
      %546 = vmatpush1.msra.mxu0 0.0
      %547 = vmatprep.subr.mxu0 0.0
      %548 = vmatpush1.msra.mxu0 0.0
      %549 = vmatprep.subr.mxu0 0.0
      %550 = vmatpush1.msra.mxu0 0.0
      %551 = vmatprep.subr.mxu0 0.0
      %552 = vmatpush1.msra.mxu0 0.0
      %553 = vmatprep.subr.mxu0 0.0
      %554 = vmatpush1.msra.mxu0 0.0
      %555 = vmatprep.subr.mxu0 0.0
      %556 = vmatpush1.msra.mxu0 0.0
      %557 = vmatprep.subr.mxu0 0.0
      %558 = vmatpush1.msra.mxu0 0.0
      %559 = vmatprep.subr.mxu0 0.0
      %560 = vmatpush1.msra.mxu0 0.0
      %561 = vmatprep.subr.mxu0 0.0
      %562 = vmatpush1.msra.mxu0 0.0
      %563 = vmatprep.subr.mxu0 0.0
      %564 = vmatpush1.msra.mxu0 0.0
      %565 = vmatprep.subr.mxu0 0.0
      %566 = vmatpush1.msra.mxu0 0.0
      %567 = vmatprep.subr.mxu0 0.0
      %568 = vmatpush1.msra.mxu0 0.0
      %569 = vmatprep.subr.mxu0 0.0
      %570 = vmatpush1.msra.mxu0 0.0
      %571 = vmatprep.subr.mxu0 0.0
      %572 = vmatpush1.msra.mxu0 0.0
      %573 = vmatprep.subr.mxu0 0.0
      %574 = vmatpush1.msra.mxu0 0.0
      %575 = vmatprep.subr.mxu0 0.0
      %576 = vmatpush1.msra.mxu0 0.0
      %577 = vmatprep.subr.mxu0 0.0
      %578 = vmatpush1.msra.mxu0 0.0
      %579 = vmatprep.subr.mxu0 0.0
      %580 = vmatpush1.msra.mxu0 0.0
      %581 = vmatprep.subr.mxu0 0.0
      %582 = vmatpush1.msra.mxu0 0.0
      %583 = vmatprep.subr.mxu0 0.0
      %584 = vmatpush1.msra.mxu0 0.0
      %585 = vmatprep.subr.mxu0 0.0
      %586 = vmatpush1.msra.mxu0 0.0
      %587 = vmatprep.subr.mxu0 0.0
      %588 = vmatpush1.msra.mxu0 0.0
      %589 = vmatprep.subr.mxu0 0.0
      %590 = vmatpush1.msra.mxu0 0.0
      %591 = vmatprep.mubr.f32.mxu0 0.0
      %592 = vmatmul.mubr.f32.gmra.mrb[0].mxu0 %v525
      %v593 = vpop.f32.mrb[0].mxu0
      %v594 = vadd.f32 %v521, %v593
      %v595 = vpop.f32.mrb[0].mxu0
      %v596 = vadd.f32 %v521, %v595
      %597 = vdwg.mxu0
      %v598 = vld [vmem:[%s344] sm:$0xff]
      %v600 = vcombine.high %v598, %v598
      %vm602 = vcmask 1043456
      %v603 = vsel %vm602, %v598, 0.0
      %v604 = vrot.slane %v603, 4
      %v605 = vadd.f32 %v603, %v604
      %v606 = vrot.slane %v605, 2
      %v607 = vadd.f32 %v605, %v606
      %v608 = vrot.slane %v607, 1
      %v609 = vadd.f32 %v607, %v608
      %v610 = vsel %vm602, %v600, 0.0
      %v611 = vrot.slane %v610, 4
      %v612 = vadd.f32 %v610, %v611
      %v613 = vrot.slane %v612, 2
      %v614 = vadd.f32 %v612, %v613
      %v615 = vrot.slane %v614, 1
      %v616 = vadd.f32 %v614, %v615
      %v617 = vmul.f32 %v598, %v598
      %v619 = vcombine.high %v617, %v617
      %v621 = vsel %vm602, %v617, 0.0
      %v622 = vrot.slane %v621, 4
      %v623 = vadd.f32 %v621, %v622
      %v624 = vrot.slane %v623, 2
      %v625 = vadd.f32 %v623, %v624
      %v626 = vrot.slane %v625, 1
      %v627 = vadd.f32 %v625, %v626
      %v628 = vsel %vm602, %v619, 0.0
      %v629 = vrot.slane %v628, 4
      %v630 = vadd.f32 %v628, %v629
      %v631 = vrot.slane %v630, 2
      %v632 = vadd.f32 %v630, %v631
      %v633 = vrot.slane %v632, 1
      %v634 = vadd.f32 %v632, %v633
      %635 = vst [vmem:[#allocation2] sm:$0xff] 0.0
      %636 = vst [vmem:[#allocation2 + $0x8] sm:$0xff] 0.0
      %637 = vst.msk [vmem:[#allocation2 + $0x10] sm:$0xff] %vm523, 0.0
      %v640 = vcombine.low %v609, %v616
      %v642 = vunpack.c.l.s4 1966171168
      %v643 = vunpack.c.0.s8 %v642
      %v644 = vlaneseq
      %v645 = vshrl.u32 %v644, 7
      %v646 = vsub.s32 %v643, %v645
      %v647 = vrot.slane %v640, %v646
      %v649 = vunpack.c.l.s4 1966171168
      %v650 = vunpack.c.0.s8 %v649
      %v651 = vlaneseq
      %v652 = vshrl.u32 %v651, 7
      %v653 = vsub.s32 %v650, %v652
      %v654 = vrot.slane %v647, %v653
      %655 = vrot.lane.b32.xlu0 %v654, 32
      %v656 = vpop.permute.xlu0 %655
      %v657 = vrot.slane %v656, 7
      %vm658 = vcmask 261120
      %v659 = vsel %vm658, %v657, %v656
      %v661 = vlaneseq
      %vm662 = vcmp.ge.s32.totalorder %v661, 32
      %vm663 = vcmp.lt.s32.totalorder %v661, 288
      %vm664 = vmand %vm662, %vm663
      %665 = vst.msk [vmem:[#allocation2] ss:$8 sm:$0x7] %vm664, %v659
      %666 = vst.msk [vmem:[#allocation2] ss:$8 sm:$0x0] %vm664, %v659
      %v669 = vcombine.low %v627, %v634
      %v671 = vunpack.c.l.s4 1966171168
      %v672 = vunpack.c.0.s8 %v671
      %v673 = vlaneseq
      %v674 = vshrl.u32 %v673, 7
      %v675 = vsub.s32 %v672, %v674
      %v676 = vrot.slane %v669, %v675
      %v678 = vunpack.c.l.s4 1966171168
      %v679 = vunpack.c.0.s8 %v678
      %v680 = vlaneseq
      %v681 = vshrl.u32 %v680, 7
      %v682 = vsub.s32 %v679, %v681
      %v683 = vrot.slane %v676, %v682
      %684 = vrot.lane.b32.xlu0 %v683, 32
      %v685 = vpop.permute.xlu0 %684
      %v686 = vrot.slane %v685, 7
      %v687 = vsel %vm658, %v686, %v685
      %s689 = scalar_lea.vmem [#allocation2], 1
      %690 = vst.msk [vmem:[%s689] ss:$8 sm:$0x7] %vm664, %v687
      %691 = vst.msk [vmem:[%s689] ss:$8 sm:$0x0] %vm664, %v687
      %v692 = vld [vmem:[#allocation2] sm:$0x3]
      %v693 = vld [vmem:[#allocation2 + $0x8] sm:$0x3]
      %v694 = vld [vmem:[#allocation2 + $0x10] sm:$0x3]
      %697 = vrot.lane.b32.xlu0 %v400, 31
      %v698 = vpop.permute.xlu0 %697
      %699 = vrot.lane.b32.xlu0 %v401, 31
      %v700 = vpop.permute.xlu0 %699
      %vm701 = vcmask 252928
      %v702 = vsel %vm701, %v698, %v700
      %v706 = vmul.f32 %v692, %v698
      %v707 = vmul.f32 %v693, %v702
      %v708 = vmul.f32 %v694, %v700
      %712 = vrot.lane.b32.xlu0 %v706, 1
      %v713 = vpop.permute.xlu0 %712
      %714 = vrot.lane.b32.xlu0 %v707, 1
      %v715 = vpop.permute.xlu0 %714
      %716 = vrot.lane.b32.xlu0 %v708, 1
      %v717 = vpop.permute.xlu0 %716
      %vm718 = vcmask 7168
      %v719 = vsel %vm718, %v713, %v715
      %v720 = vsel %vm718, %v715, %v717
      %v724 = vadd.f32 %v692, %v713
      %v725 = vadd.f32 %v693, %v719
      %v726 = vadd.f32 %v694, %v720
      %729 = vrot.lane.b32.xlu0 %v412, 33
      %v730 = vpop.permute.xlu0 %729
      %731 = vrot.lane.b32.xlu0 %v413, 33
      %v732 = vpop.permute.xlu0 %731
      %vm733 = vcmask 269312
      %v734 = vsel %vm733, %v730, %v732
      %v738 = vmul.f32 %v692, %v730
      %v739 = vmul.f32 %v693, %v734
      %v740 = vmul.f32 %v694, %v732
      %744 = vrot.lane.b32.xlu0 %v738, 127
      %v745 = vpop.permute.xlu0 %744
      %746 = vrot.lane.b32.xlu0 %v739, 127
      %v747 = vpop.permute.xlu0 %746
      %748 = vrot.lane.b32.xlu0 %v740, 127
      %v749 = vpop.permute.xlu0 %748
      %vm750 = vcmask 1039360
      %v751 = vsel %vm750, %v745, %v747
      %v752 = vsel %vm750, %v747, %v749
      %v756 = vadd.f32 %v724, %v751
      %v757 = vadd.f32 %v725, %v752
      %v758 = vadd.f32 %v726, %v749
      %vm759 = vcmask 1041664
      %760 = vst.msk [vmem:[#allocation2] sm:$0x3] %vm759, %v756
      %761 = vst [vmem:[#allocation2 + $0x8] sm:$0x3] %v757
      %vm762 = vcmask 254976
      %763 = vst.msk [vmem:[#allocation2 + $0x10] sm:$0x3] %vm762, %v758
      %v764 = vld [vmem:[#allocation2] sm:$0x3]
      %v765 = vld [vmem:[#allocation2 + $0x8] sm:$0x3]
      %v766 = vld [vmem:[#allocation2 + $0x10] sm:$0x3]
      %770 = vrot.lane.b32.xlu0 %v764, 16
      %v771 = vpop.permute.xlu0 %770
      %772 = vrot.lane.b32.xlu0 %v765, 16
      %v773 = vpop.permute.xlu0 %772
      %774 = vrot.lane.b32.xlu0 %v766, 16
      %v775 = vpop.permute.xlu0 %774
      %vm776 = vcmask 130048
      %v777 = vsel %vm776, %v771, %v773
      %v778 = vsel %vm776, %v773, %v775
      %v782 = vadd.f32 %v764, %v771
      %v783 = vadd.f32 %v765, %v777
      %v784 = vadd.f32 %v766, %v778
      %785 = vrot.lane.b32.xlu0 %v764, 112
      %v786 = vpop.permute.xlu0 %785
      %787 = vrot.lane.b32.xlu0 %v765, 112
      %v788 = vpop.permute.xlu0 %787
      %789 = vrot.lane.b32.xlu0 %v766, 112
      %v790 = vpop.permute.xlu0 %789
      %vm791 = vcmask 916480
      %v792 = vsel %vm791, %v786, %v788
      %v793 = vsel %vm791, %v788, %v790
      %v797 = vadd.f32 %v782, %v792
      %v798 = vadd.f32 %v783, %v793
      %v799 = vadd.f32 %v784, %v790
      %v800 = vld [vmem:[%s4] ss:$2 sm:$0x3]
      %v802 = vlaneseq
      %v803 = vshrl.u32 %v802, 7
      %v804 = vsub.s32 0, %v803
      %v805 = vrot.slane %v800, %v804
      %v806 = vlaneseq
      %v807 = vshrl.u32 %v806, 7
      %v808 = vsub.s32 1, %v807
      %v809 = vrot.slane %v800, %v808
      %810 = vrot.lane.b32.xlu0 %v805, 32
      %v811 = vpop.permute.xlu0 %810
      %812 = vrot.lane.b32.xlu0 %v809, 32
      %v813 = vpop.permute.xlu0 %812
      %v814 = vsel %vm658, %v811, %v813
      %v818 = vmul.f32 %v797, %v811
      %v819 = vmul.f32 %v798, %v814
      %v820 = vmul.f32 %v799, %v813
      %v821 = vmul.f32 %v818, %v818
      %v822 = vmul.f32 %v819, %v819
      %v823 = vmul.f32 %v820, %v820
      %v827 = vrot.slane %v821, 7
      %v828 = vrot.slane %v822, 7
      %v829 = vrot.slane %v823, 7
      %v833 = vsub.f32 %v818, %v827
      %v834 = vsub.f32 %v819, %v828
      %v835 = vsub.f32 %v820, %v829
      %v836 = vld [vmem:[%s5] sm:$0xf]
      %838 = vset.pattern.permute.xlu0 0
      %839 = vperm.xlu0 %838, %v836
      %v840 = vpop.permute.xlu0 %839
      %v842 = vlaneseq
      %v843 = vshrl.u32 %v842, 7
      %v844 = vsub.s32 1, %v843
      %v845 = vrot.slane %v833, %v844
      %v846 = vlaneseq
      %v847 = vshrl.u32 %v846, 7
      %v848 = vsub.s32 1, %v847
      %v849 = vrot.slane %v834, %v848
      %v850 = vlaneseq
      %v851 = vshrl.u32 %v850, 7
      %v852 = vsub.s32 1, %v851
      %v853 = vrot.slane %v835, %v852
      %v854 = vmul.f32 %v840, %v845
      %v855 = vmul.f32 %v840, %v849
      %v856 = vmul.f32 %v840, %v853
      %857 = vset.pattern.permute.xlu0 1
      %858 = vperm.xlu0 %857, %v836
      %v859 = vpop.permute.xlu0 %858
      %v861 = vadd.f32 %v854, %v859
      %v862 = vadd.f32 %v855, %v859
      %v863 = vadd.f32 %v856, %v859
      %v864 = vmax.f32 %v861, 0.0
      %v865 = vmax.f32 %v862, 0.0
      %v866 = vmax.f32 %v863, 0.0
      %v867 = vld [vmem:[%s6] sm:$0xf]
      %868 = vset.pattern.permute.xlu0 2
      %869 = vperm.xlu0 %868, %v836
      %v870 = vpop.permute.xlu0 %869
      %875 = vrot.lane.b32.xlu0 %v864, 96
      %v876 = vpop.permute.xlu0 %875
      %877 = vrot.lane.b32.xlu0 %v865, 96
      %v878 = vpop.permute.xlu0 %877
      %879 = vrot.lane.b32.xlu0 %v866, 96
      %v880 = vpop.permute.xlu0 %879
      %vm881 = vcmask 785408
      %v882 = vsel %vm881, %v876, %v878
      %v883 = vsel %vm881, %v878, %v880
      %vm884 = vcmask 31744
      %v886 = vsel %vm884, %v867, 0
      %v888 = vsel %vm602, %v882, 0
      %v890 = vsel %vm602, %v883, 0
      %892 = vmatprep.subr.mxu0 %v890
      %893 = vmatpush1.msra.mxu0 %v888
      %894 = vmatprep.subr.mxu0 0.0
      %895 = vmatpush1.msra.mxu0 0.0
      %896 = vmatprep.subr.mxu0 0.0
      %897 = vmatpush1.msra.mxu0 0.0
      %898 = vmatprep.subr.mxu0 0.0
      %899 = vmatpush1.msra.mxu0 0.0
      %900 = vmatprep.subr.mxu0 0.0
      %901 = vmatpush1.msra.mxu0 0.0
      %902 = vmatprep.subr.mxu0 0.0
      %903 = vmatpush1.msra.mxu0 0.0
      %904 = vmatprep.subr.mxu0 0.0
      %905 = vmatpush1.msra.mxu0 0.0
      %906 = vmatprep.subr.mxu0 0.0
      %907 = vmatpush1.msra.mxu0 0.0
      %908 = vmatprep.subr.mxu0 0.0
      %909 = vmatpush1.msra.mxu0 0.0
      %910 = vmatprep.subr.mxu0 0.0
      %911 = vmatpush1.msra.mxu0 0.0
      %912 = vmatprep.subr.mxu0 0.0
      %913 = vmatpush1.msra.mxu0 0.0
      %914 = vmatprep.subr.mxu0 0.0
      %915 = vmatpush1.msra.mxu0 0.0
      %916 = vmatprep.subr.mxu0 0.0
      %917 = vmatpush1.msra.mxu0 0.0
      %918 = vmatprep.subr.mxu0 0.0
      %919 = vmatpush1.msra.mxu0 0.0
      %920 = vmatprep.subr.mxu0 0.0
      %921 = vmatpush1.msra.mxu0 0.0
      %922 = vmatprep.subr.mxu0 0.0
      %923 = vmatpush1.msra.mxu0 0.0
      %924 = vmatprep.subr.mxu0 0.0
      %925 = vmatpush1.msra.mxu0 0.0
      %926 = vmatprep.subr.mxu0 0.0
      %927 = vmatpush1.msra.mxu0 0.0
      %928 = vmatprep.subr.mxu0 0.0
      %929 = vmatpush1.msra.mxu0 0.0
      %930 = vmatprep.subr.mxu0 0.0
      %931 = vmatpush1.msra.mxu0 0.0
      %932 = vmatprep.subr.mxu0 0.0
      %933 = vmatpush1.msra.mxu0 0.0
      %934 = vmatprep.subr.mxu0 0.0
      %935 = vmatpush1.msra.mxu0 0.0
      %936 = vmatprep.subr.mxu0 0.0
      %937 = vmatpush1.msra.mxu0 0.0
      %938 = vmatprep.subr.mxu0 0.0
      %939 = vmatpush1.msra.mxu0 0.0
      %940 = vmatprep.subr.mxu0 0.0
      %941 = vmatpush1.msra.mxu0 0.0
      %942 = vmatprep.subr.mxu0 0.0
      %943 = vmatpush1.msra.mxu0 0.0
      %944 = vmatprep.subr.mxu0 0.0
      %945 = vmatpush1.msra.mxu0 0.0
      %946 = vmatprep.subr.mxu0 0.0
      %947 = vmatpush1.msra.mxu0 0.0
      %948 = vmatprep.subr.mxu0 0.0
      %949 = vmatpush1.msra.mxu0 0.0
      %950 = vmatprep.subr.mxu0 0.0
      %951 = vmatpush1.msra.mxu0 0.0
      %952 = vmatprep.subr.mxu0 0.0
      %953 = vmatpush1.msra.mxu0 0.0
      %954 = vmatprep.subr.mxu0 0.0
      %955 = vmatpush1.msra.mxu0 0.0
      %956 = vmatprep.mubr.f32.mxu0 0.0
      %957 = vmatmul.mubr.f32.gmra.mrb[0].mxu0 %v886
      %v958 = vpop.f32.mrb[0].mxu0
      %v959 = vadd.f32 %v870, %v958
      %v960 = vpop.f32.mrb[0].mxu0
      %v961 = vadd.f32 %v870, %v960
      %962 = vdwg.mxu0
      %v963 = vmax.f32 %v959, 0.0
      %v964 = vmax.f32 %v961, 0.0
      %s965 = scalar_lea.vmem %s6, 4
      %v966 = vld [vmem:[%s965] sm:$0xf]
      %v968 = vsel %vm884, %v966, 0
      %v971 = vsel %vm602, %v963, 0
      %v974 = vsel %vm602, %v964, 0
      %976 = vmatprep.subr.mxu0 %v974
      %977 = vmatpush1.msra.mxu0 %v971
      %978 = vmatprep.subr.mxu0 0.0
      %979 = vmatpush1.msra.mxu0 0.0
      %980 = vmatprep.subr.mxu0 0.0
      %981 = vmatpush1.msra.mxu0 0.0
      %982 = vmatprep.subr.mxu0 0.0
      %983 = vmatpush1.msra.mxu0 0.0
      %984 = vmatprep.subr.mxu0 0.0
      %985 = vmatpush1.msra.mxu0 0.0
      %986 = vmatprep.subr.mxu0 0.0
      %987 = vmatpush1.msra.mxu0 0.0
      %988 = vmatprep.subr.mxu0 0.0
      %989 = vmatpush1.msra.mxu0 0.0
      %990 = vmatprep.subr.mxu0 0.0
      %991 = vmatpush1.msra.mxu0 0.0
      %992 = vmatprep.subr.mxu0 0.0
      %993 = vmatpush1.msra.mxu0 0.0
      %994 = vmatprep.subr.mxu0 0.0
      %995 = vmatpush1.msra.mxu0 0.0
      %996 = vmatprep.subr.mxu0 0.0
      %997 = vmatpush1.msra.mxu0 0.0
      %998 = vmatprep.subr.mxu0 0.0
      %999 = vmatpush1.msra.mxu0 0.0
      %1000 = vmatprep.subr.mxu0 0.0
      %1001 = vmatpush1.msra.mxu0 0.0
      %1002 = vmatprep.subr.mxu0 0.0
      %1003 = vmatpush1.msra.mxu0 0.0
      %1004 = vmatprep.subr.mxu0 0.0
      %1005 = vmatpush1.msra.mxu0 0.0
      %1006 = vmatprep.subr.mxu0 0.0
      %1007 = vmatpush1.msra.mxu0 0.0
      %1008 = vmatprep.subr.mxu0 0.0
      %1009 = vmatpush1.msra.mxu0 0.0
      %1010 = vmatprep.subr.mxu0 0.0
      %1011 = vmatpush1.msra.mxu0 0.0
      %1012 = vmatprep.subr.mxu0 0.0
      %1013 = vmatpush1.msra.mxu0 0.0
      %1014 = vmatprep.subr.mxu0 0.0
      %1015 = vmatpush1.msra.mxu0 0.0
      %1016 = vmatprep.subr.mxu0 0.0
      %1017 = vmatpush1.msra.mxu0 0.0
      %1018 = vmatprep.subr.mxu0 0.0
      %1019 = vmatpush1.msra.mxu0 0.0
      %1020 = vmatprep.subr.mxu0 0.0
      %1021 = vmatpush1.msra.mxu0 0.0
      %1022 = vmatprep.subr.mxu0 0.0
      %1023 = vmatpush1.msra.mxu0 0.0
      %1024 = vmatprep.subr.mxu0 0.0
      %1025 = vmatpush1.msra.mxu0 0.0
      %1026 = vmatprep.subr.mxu0 0.0
      %1027 = vmatpush1.msra.mxu0 0.0
      %1028 = vmatprep.subr.mxu0 0.0
      %1029 = vmatpush1.msra.mxu0 0.0
      %1030 = vmatprep.subr.mxu0 0.0
      %1031 = vmatpush1.msra.mxu0 0.0
      %1032 = vmatprep.subr.mxu0 0.0
      %1033 = vmatpush1.msra.mxu0 0.0
      %1034 = vmatprep.subr.mxu0 0.0
      %1035 = vmatpush1.msra.mxu0 0.0
      %1036 = vmatprep.subr.mxu0 0.0
      %1037 = vmatpush1.msra.mxu0 0.0
      %1038 = vmatprep.subr.mxu0 0.0
      %1039 = vmatpush1.msra.mxu0 0.0
      %1040 = vmatprep.mubr.f32.mxu0 0.0
      %1041 = vmatmul.mubr.f32.gmra.mrb[0].mxu0 %v968
      %v1042 = vpop.f32.mrb[0].mxu0
      %v1043 = vadd.f32 0.0, %v1042
      %v1044 = vpop.f32.mrb[0].mxu0
      %v1045 = vadd.f32 0.0, %v1044
      %1046 = vdwg.mxu0
      %v1047 = vmul.f32 %v1043, %v598
      %v1048 = vmul.f32 %v1045, %v600
      %v1049 = vsub.f32 1.0, %v1043
      %v1050 = vsub.f32 1.0, %v1045
      %v1051 = vlaneseq
      %v1052 = vshrl.u32 %v1051, 7
      %v1053 = vsub.s32 0, %v1052
      %v1054 = vrot.slane %v818, %v1053
      %v1055 = vlaneseq
      %v1056 = vshrl.u32 %v1055, 7
      %v1057 = vsub.s32 0, %v1056
      %v1058 = vrot.slane %v819, %v1057
      %v1059 = vlaneseq
      %v1060 = vshrl.u32 %v1059, 7
      %v1061 = vsub.s32 0, %v1060
      %v1062 = vrot.slane %v820, %v1061
      %1065 = vrot.lane.b32.xlu0 %v1049, 32
      %v1066 = vpop.permute.xlu0 %1065
      %1067 = vrot.lane.b32.xlu0 %v1050, 32
      %v1068 = vpop.permute.xlu0 %1067
      %v1069 = vsel %vm658, %v1066, %v1068
      %v1073 = vmul.f32 %v1054, %v1066
      %v1074 = vmul.f32 %v1058, %v1069
      %v1075 = vmul.f32 %v1062, %v1068
      %1079 = vrot.lane.b32.xlu0 %v1073, 96
      %v1080 = vpop.permute.xlu0 %1079
      %1081 = vrot.lane.b32.xlu0 %v1074, 96
      %v1082 = vpop.permute.xlu0 %1081
      %1083 = vrot.lane.b32.xlu0 %v1075, 96
      %v1084 = vpop.permute.xlu0 %1083
      %v1085 = vsel %vm881, %v1080, %v1082
      %v1086 = vsel %vm881, %v1082, %v1084
      %v1089 = vadd.f32 %v1047, %v1085
      %v1090 = vadd.f32 %v1048, %v1086
      %s1091 = scalar_lea.vmem %s6, 8
      %v1092 = vld [vmem:[%s1091] sm:$0xf]
      %1093 = vst.msk [vmem:[#allocation2] ss:$8 sm:$0x7] %vm664, %v659
      %1094 = vst.msk [vmem:[#allocation2] ss:$8 sm:$0x0] %vm664, %v659
      %1095 = vst.msk [vmem:[%s689] ss:$8 sm:$0x7] %vm664, %v687
      %1096 = vst.msk [vmem:[%s689] ss:$8 sm:$0x0] %vm664, %v687
      %v1097 = vld [vmem:[#allocation2] sm:$0x3]
      %v1098 = vld [vmem:[#allocation2 + $0x8] sm:$0x3]
      %v1099 = vld [vmem:[#allocation2 + $0x10] sm:$0x3]
      %1102 = vrot.lane.b32.xlu0 %v388, 30
      %v1103 = vpop.permute.xlu0 %1102
      %1104 = vrot.lane.b32.xlu0 %v389, 30
      %v1105 = vpop.permute.xlu0 %1104
      %vm1106 = vcmask 244736
      %v1107 = vsel %vm1106, %v1103, %v1105
      %v1111 = vmul.f32 %v1097, %v1103
      %v1112 = vmul.f32 %v1098, %v1107
      %v1113 = vmul.f32 %v1099, %v1105
      %1117 = vrot.lane.b32.xlu0 %v1111, 2
      %v1118 = vpop.permute.xlu0 %1117
      %1119 = vrot.lane.b32.xlu0 %v1112, 2
      %v1120 = vpop.permute.xlu0 %1119
      %1121 = vrot.lane.b32.xlu0 %v1113, 2
      %v1122 = vpop.permute.xlu0 %1121
      %vm1123 = vcmask 15360
      %v1124 = vsel %vm1123, %v1118, %v1120
      %v1125 = vsel %vm1123, %v1120, %v1122
      %v1129 = vadd.f32 %v1097, %v1118
      %v1130 = vadd.f32 %v1098, %v1124
      %v1131 = vadd.f32 %v1099, %v1125
      %v1132 = vmul.f32 %v1097, %v698
      %v1133 = vmul.f32 %v1098, %v702
      %v1134 = vmul.f32 %v1099, %v700
      %1138 = vrot.lane.b32.xlu0 %v1132, 1
      %v1139 = vpop.permute.xlu0 %1138
      %1140 = vrot.lane.b32.xlu0 %v1133, 1
      %v1141 = vpop.permute.xlu0 %1140
      %1142 = vrot.lane.b32.xlu0 %v1134, 1
      %v1143 = vpop.permute.xlu0 %1142
      %v1144 = vsel %vm718, %v1139, %v1141
      %v1145 = vsel %vm718, %v1141, %v1143
      %v1149 = vadd.f32 %v1129, %v1139
      %v1150 = vadd.f32 %v1130, %v1144
      %v1151 = vadd.f32 %v1131, %v1145
      %v1152 = vmul.f32 %v1097, %v730
      %v1153 = vmul.f32 %v1098, %v734
      %v1154 = vmul.f32 %v1099, %v732
      %1158 = vrot.lane.b32.xlu0 %v1152, 127
      %v1159 = vpop.permute.xlu0 %1158
      %1160 = vrot.lane.b32.xlu0 %v1153, 127
      %v1161 = vpop.permute.xlu0 %1160
      %1162 = vrot.lane.b32.xlu0 %v1154, 127
      %v1163 = vpop.permute.xlu0 %1162
      %v1164 = vsel %vm750, %v1159, %v1161
      %v1165 = vsel %vm750, %v1161, %v1163
      %v1169 = vadd.f32 %v1149, %v1164
      %v1170 = vadd.f32 %v1150, %v1165
      %v1171 = vadd.f32 %v1151, %v1163
      %1174 = vrot.lane.b32.xlu0 %v424, 34
      %v1175 = vpop.permute.xlu0 %1174
      %1176 = vrot.lane.b32.xlu0 %v425, 34
      %v1177 = vpop.permute.xlu0 %1176
      %vm1178 = vcmask 277504
      %v1179 = vsel %vm1178, %v1175, %v1177
      %v1183 = vmul.f32 %v1097, %v1175
      %v1184 = vmul.f32 %v1098, %v1179
      %v1185 = vmul.f32 %v1099, %v1177
      %1189 = vrot.lane.b32.xlu0 %v1183, 126
      %v1190 = vpop.permute.xlu0 %1189
      %1191 = vrot.lane.b32.xlu0 %v1184, 126
      %v1192 = vpop.permute.xlu0 %1191
      %1193 = vrot.lane.b32.xlu0 %v1185, 126
      %v1194 = vpop.permute.xlu0 %1193
      %vm1195 = vcmask 1031168
      %v1196 = vsel %vm1195, %v1190, %v1192
      %v1197 = vsel %vm1195, %v1192, %v1194
      %v1201 = vadd.f32 %v1169, %v1196
      %v1202 = vadd.f32 %v1170, %v1197
      %v1203 = vadd.f32 %v1171, %v1194
      %1204 = vst.msk [vmem:[#allocation2] sm:$0x3] %vm759, %v1201
      %1205 = vst [vmem:[#allocation2 + $0x8] sm:$0x3] %v1202
      %1206 = vst.msk [vmem:[#allocation2 + $0x10] sm:$0x3] %vm762, %v1203
      %v1207 = vld [vmem:[#allocation2] sm:$0x3]
      %v1208 = vld [vmem:[#allocation2 + $0x8] sm:$0x3]
      %v1209 = vld [vmem:[#allocation2 + $0x10] sm:$0x3]
      %1212 = vrot.lane.b32.xlu0 %v1207, 32
      %v1213 = vpop.permute.xlu0 %1212
      %1214 = vrot.lane.b32.xlu0 %v1208, 32
      %v1215 = vpop.permute.xlu0 %1214
      %v1216 = vsel %vm658, %v1213, %v1215
      %v1220 = vadd.f32 %v1207, %v1213
      %v1221 = vadd.f32 %v1208, %v1216
      %v1222 = vadd.f32 %v1209, %v1215
      %1224 = vrot.lane.b32.xlu0 %v1207, 16
      %v1225 = vpop.permute.xlu0 %1224
      %1226 = vrot.lane.b32.xlu0 %v1208, 16
      %v1227 = vpop.permute.xlu0 %1226
      %1228 = vrot.lane.b32.xlu0 %v1209, 16
      %v1229 = vpop.permute.xlu0 %1228
      %v1230 = vsel %vm776, %v1225, %v1227
      %v1231 = vsel %vm776, %v1227, %v1229
      %v1235 = vadd.f32 %v1220, %v1225
      %v1236 = vadd.f32 %v1221, %v1230
      %v1237 = vadd.f32 %v1222, %v1231
      %1238 = vrot.lane.b32.xlu0 %v1207, 112
      %v1239 = vpop.permute.xlu0 %1238
      %1240 = vrot.lane.b32.xlu0 %v1208, 112
      %v1241 = vpop.permute.xlu0 %1240
      %1242 = vrot.lane.b32.xlu0 %v1209, 112
      %v1243 = vpop.permute.xlu0 %1242
      %v1244 = vsel %vm791, %v1239, %v1241
      %v1245 = vsel %vm791, %v1241, %v1243
      %v1249 = vadd.f32 %v1235, %v1244
      %v1250 = vadd.f32 %v1236, %v1245
      %v1251 = vadd.f32 %v1237, %v1243
      %1252 = vrot.lane.b32.xlu0 %v1207, 96
      %v1253 = vpop.permute.xlu0 %1252
      %1254 = vrot.lane.b32.xlu0 %v1208, 96
      %v1255 = vpop.permute.xlu0 %1254
      %1256 = vrot.lane.b32.xlu0 %v1209, 96
      %v1257 = vpop.permute.xlu0 %1256
      %v1258 = vsel %vm881, %v1253, %v1255
      %v1259 = vsel %vm881, %v1255, %v1257
      %v1263 = vadd.f32 %v1249, %v1258
      %v1264 = vadd.f32 %v1250, %v1259
      %v1265 = vadd.f32 %v1251, %v1257
      %s1266 = scalar_lea.vmem %s4, 1
      %v1267 = vld [vmem:[%s1266] ss:$2 sm:$0x3]
      %v1269 = vlaneseq
      %v1270 = vshrl.u32 %v1269, 7
      %v1271 = vsub.s32 0, %v1270
      %v1272 = vrot.slane %v1267, %v1271
      %v1273 = vlaneseq
      %v1274 = vshrl.u32 %v1273, 7
      %v1275 = vsub.s32 1, %v1274
      %v1276 = vrot.slane %v1267, %v1275
      %1277 = vrot.lane.b32.xlu0 %v1272, 32
      %v1278 = vpop.permute.xlu0 %1277
      %1279 = vrot.lane.b32.xlu0 %v1276, 32
      %v1280 = vpop.permute.xlu0 %1279
      %v1281 = vsel %vm658, %v1278, %v1280
      %v1285 = vmul.f32 %v1263, %v1278
      %v1286 = vmul.f32 %v1264, %v1281
      %v1287 = vmul.f32 %v1265, %v1280
      %v1288 = vmul.f32 %v1285, %v1285
      %v1289 = vmul.f32 %v1286, %v1286
      %v1290 = vmul.f32 %v1287, %v1287
      %v1294 = vrot.slane %v1288, 7
      %v1295 = vrot.slane %v1289, 7
      %v1296 = vrot.slane %v1290, 7
      %v1300 = vsub.f32 %v1285, %v1294
      %v1301 = vsub.f32 %v1286, %v1295
      %v1302 = vsub.f32 %v1287, %v1296
      %s1303 = scalar_lea.vmem %s5, 4
      %v1304 = vld [vmem:[%s1303] sm:$0xf]
      %1306 = vset.pattern.permute.xlu0 0
      %1307 = vperm.xlu0 %1306, %v1304
      %v1308 = vpop.permute.xlu0 %1307
      %v1310 = vlaneseq
      %v1311 = vshrl.u32 %v1310, 7
      %v1312 = vsub.s32 1, %v1311
      %v1313 = vrot.slane %v1300, %v1312
      %v1314 = vlaneseq
      %v1315 = vshrl.u32 %v1314, 7
      %v1316 = vsub.s32 1, %v1315
      %v1317 = vrot.slane %v1301, %v1316
      %v1318 = vlaneseq
      %v1319 = vshrl.u32 %v1318, 7
      %v1320 = vsub.s32 1, %v1319
      %v1321 = vrot.slane %v1302, %v1320
      %v1322 = vmul.f32 %v1308, %v1313
      %v1323 = vmul.f32 %v1308, %v1317
      %v1324 = vmul.f32 %v1308, %v1321
      %1325 = vset.pattern.permute.xlu0 1
      %1326 = vperm.xlu0 %1325, %v1304
      %v1327 = vpop.permute.xlu0 %1326
      %v1329 = vadd.f32 %v1322, %v1327
      %v1330 = vadd.f32 %v1323, %v1327
      %v1331 = vadd.f32 %v1324, %v1327
      %v1332 = vmax.f32 %v1329, 0.0
      %v1333 = vmax.f32 %v1330, 0.0
      %v1334 = vmax.f32 %v1331, 0.0
      %s1335 = scalar_lea.vmem %s6, 12
      %v1336 = vld [vmem:[%s1335] sm:$0xf]
      %1337 = vset.pattern.permute.xlu0 2
      %1338 = vperm.xlu0 %1337, %v1304
      %v1339 = vpop.permute.xlu0 %1338
      %1344 = vrot.lane.b32.xlu0 %v1332, 96
      %v1345 = vpop.permute.xlu0 %1344
      %1346 = vrot.lane.b32.xlu0 %v1333, 96
      %v1347 = vpop.permute.xlu0 %1346
      %1348 = vrot.lane.b32.xlu0 %v1334, 96
      %v1349 = vpop.permute.xlu0 %1348
      %v1350 = vsel %vm881, %v1345, %v1347
      %v1351 = vsel %vm881, %v1347, %v1349
      %v1353 = vsel %vm884, %v1336, 0
      %v1355 = vsel %vm602, %v1350, 0
      %v1357 = vsel %vm602, %v1351, 0
      %1359 = vmatprep.subr.mxu0 %v1357
      %1360 = vmatpush1.msra.mxu0 %v1355
      %1361 = vmatprep.subr.mxu0 0.0
      %1362 = vmatpush1.msra.mxu0 0.0
      %1363 = vmatprep.subr.mxu0 0.0
      %1364 = vmatpush1.msra.mxu0 0.0
      %1365 = vmatprep.subr.mxu0 0.0
      %1366 = vmatpush1.msra.mxu0 0.0
      %1367 = vmatprep.subr.mxu0 0.0
      %1368 = vmatpush1.msra.mxu0 0.0
      %1369 = vmatprep.subr.mxu0 0.0
      %1370 = vmatpush1.msra.mxu0 0.0
      %1371 = vmatprep.subr.mxu0 0.0
      %1372 = vmatpush1.msra.mxu0 0.0
      %1373 = vmatprep.subr.mxu0 0.0
      %1374 = vmatpush1.msra.mxu0 0.0
      %1375 = vmatprep.subr.mxu0 0.0
      %1376 = vmatpush1.msra.mxu0 0.0
      %1377 = vmatprep.subr.mxu0 0.0
      %1378 = vmatpush1.msra.mxu0 0.0
      %1379 = vmatprep.subr.mxu0 0.0
      %1380 = vmatpush1.msra.mxu0 0.0
      %1381 = vmatprep.subr.mxu0 0.0
      %1382 = vmatpush1.msra.mxu0 0.0
      %1383 = vmatprep.subr.mxu0 0.0
      %1384 = vmatpush1.msra.mxu0 0.0
      %1385 = vmatprep.subr.mxu0 0.0
      %1386 = vmatpush1.msra.mxu0 0.0
      %1387 = vmatprep.subr.mxu0 0.0
      %1388 = vmatpush1.msra.mxu0 0.0
      %1389 = vmatprep.subr.mxu0 0.0
      %1390 = vmatpush1.msra.mxu0 0.0
      %1391 = vmatprep.subr.mxu0 0.0
      %1392 = vmatpush1.msra.mxu0 0.0
      %1393 = vmatprep.subr.mxu0 0.0
      %1394 = vmatpush1.msra.mxu0 0.0
      %1395 = vmatprep.subr.mxu0 0.0
      %1396 = vmatpush1.msra.mxu0 0.0
      %1397 = vmatprep.subr.mxu0 0.0
      %1398 = vmatpush1.msra.mxu0 0.0
      %1399 = vmatprep.subr.mxu0 0.0
      %1400 = vmatpush1.msra.mxu0 0.0
      %1401 = vmatprep.subr.mxu0 0.0
      %1402 = vmatpush1.msra.mxu0 0.0
      %1403 = vmatprep.subr.mxu0 0.0
      %1404 = vmatpush1.msra.mxu0 0.0
      %1405 = vmatprep.subr.mxu0 0.0
      %1406 = vmatpush1.msra.mxu0 0.0
      %1407 = vmatprep.subr.mxu0 0.0
      %1408 = vmatpush1.msra.mxu0 0.0
      %1409 = vmatprep.subr.mxu0 0.0
      %1410 = vmatpush1.msra.mxu0 0.0
      %1411 = vmatprep.subr.mxu0 0.0
      %1412 = vmatpush1.msra.mxu0 0.0
      %1413 = vmatprep.subr.mxu0 0.0
      %1414 = vmatpush1.msra.mxu0 0.0
      %1415 = vmatprep.subr.mxu0 0.0
      %1416 = vmatpush1.msra.mxu0 0.0
      %1417 = vmatprep.subr.mxu0 0.0
      %1418 = vmatpush1.msra.mxu0 0.0
      %1419 = vmatprep.subr.mxu0 0.0
      %1420 = vmatpush1.msra.mxu0 0.0
      %1421 = vmatprep.subr.mxu0 0.0
      %1422 = vmatpush1.msra.mxu0 0.0
      %1423 = vmatprep.mubr.f32.mxu0 0.0
      %1424 = vmatmul.mubr.f32.gmra.mrb[0].mxu0 %v1353
      %v1425 = vpop.f32.mrb[0].mxu0
      %v1426 = vadd.f32 %v1339, %v1425
      %v1427 = vpop.f32.mrb[0].mxu0
      %v1428 = vadd.f32 %v1339, %v1427
      %1429 = vdwg.mxu0
      %v1430 = vmax.f32 %v1426, 0.0
      %v1431 = vmax.f32 %v1428, 0.0
      %s1432 = scalar_lea.vmem %s6, 16
      %v1433 = vld [vmem:[%s1432] sm:$0xf]
      %v1435 = vsel %vm884, %v1433, 0
      %v1438 = vsel %vm602, %v1430, 0
      %v1441 = vsel %vm602, %v1431, 0
      %1443 = vmatprep.subr.mxu0 %v1441
      %1444 = vmatpush1.msra.mxu0 %v1438
      %1445 = vmatprep.subr.mxu0 0.0
      %1446 = vmatpush1.msra.mxu0 0.0
      %1447 = vmatprep.subr.mxu0 0.0
      %1448 = vmatpush1.msra.mxu0 0.0
      %1449 = vmatprep.subr.mxu0 0.0
      %1450 = vmatpush1.msra.mxu0 0.0
      %1451 = vmatprep.subr.mxu0 0.0
      %1452 = vmatpush1.msra.mxu0 0.0
      %1453 = vmatprep.subr.mxu0 0.0
      %1454 = vmatpush1.msra.mxu0 0.0
      %1455 = vmatprep.subr.mxu0 0.0
      %1456 = vmatpush1.msra.mxu0 0.0
      %1457 = vmatprep.subr.mxu0 0.0
      %1458 = vmatpush1.msra.mxu0 0.0
      %1459 = vmatprep.subr.mxu0 0.0
      %1460 = vmatpush1.msra.mxu0 0.0
      %1461 = vmatprep.subr.mxu0 0.0
      %1462 = vmatpush1.msra.mxu0 0.0
      %1463 = vmatprep.subr.mxu0 0.0
      %1464 = vmatpush1.msra.mxu0 0.0
      %1465 = vmatprep.subr.mxu0 0.0
      %1466 = vmatpush1.msra.mxu0 0.0
      %1467 = vmatprep.subr.mxu0 0.0
      %1468 = vmatpush1.msra.mxu0 0.0
      %1469 = vmatprep.subr.mxu0 0.0
      %1470 = vmatpush1.msra.mxu0 0.0
      %1471 = vmatprep.subr.mxu0 0.0
      %1472 = vmatpush1.msra.mxu0 0.0
      %1473 = vmatprep.subr.mxu0 0.0
      %1474 = vmatpush1.msra.mxu0 0.0
      %1475 = vmatprep.subr.mxu0 0.0
      %1476 = vmatpush1.msra.mxu0 0.0
      %1477 = vmatprep.subr.mxu0 0.0
      %1478 = vmatpush1.msra.mxu0 0.0
      %1479 = vmatprep.subr.mxu0 0.0
      %1480 = vmatpush1.msra.mxu0 0.0
      %1481 = vmatprep.subr.mxu0 0.0
      %1482 = vmatpush1.msra.mxu0 0.0
      %1483 = vmatprep.subr.mxu0 0.0
      %1484 = vmatpush1.msra.mxu0 0.0
      %1485 = vmatprep.subr.mxu0 0.0
      %1486 = vmatpush1.msra.mxu0 0.0
      %1487 = vmatprep.subr.mxu0 0.0
      %1488 = vmatpush1.msra.mxu0 0.0
      %1489 = vmatprep.subr.mxu0 0.0
      %1490 = vmatpush1.msra.mxu0 0.0
      %1491 = vmatprep.subr.mxu0 0.0
      %1492 = vmatpush1.msra.mxu0 0.0
      %1493 = vmatprep.subr.mxu0 0.0
      %1494 = vmatpush1.msra.mxu0 0.0
      %1495 = vmatprep.subr.mxu0 0.0
      %1496 = vmatpush1.msra.mxu0 0.0
      %1497 = vmatprep.subr.mxu0 0.0
      %1498 = vmatpush1.msra.mxu0 0.0
      %1499 = vmatprep.subr.mxu0 0.0
      %1500 = vmatpush1.msra.mxu0 0.0
      %1501 = vmatprep.subr.mxu0 0.0
      %1502 = vmatpush1.msra.mxu0 0.0
      %1503 = vmatprep.subr.mxu0 0.0
      %1504 = vmatpush1.msra.mxu0 0.0
      %1505 = vmatprep.subr.mxu0 0.0
      %1506 = vmatpush1.msra.mxu0 0.0
      %1507 = vmatprep.mubr.f32.mxu0 0.0
      %1508 = vmatmul.mubr.f32.gmra.mrb[0].mxu0 %v1435
      %v1509 = vpop.f32.mrb[0].mxu0
      %v1510 = vadd.f32 0.0, %v1509
      %v1511 = vpop.f32.mrb[0].mxu0
      %v1512 = vadd.f32 0.0, %v1511
      %1513 = vdwg.mxu0
      %v1514 = vmul.f32 %v1510, %v598
      %v1515 = vmul.f32 %v1512, %v600
      %v1516 = vsub.f32 1.0, %v1510
      %v1517 = vsub.f32 1.0, %v1512
      %v1518 = vlaneseq
      %v1519 = vshrl.u32 %v1518, 7
      %v1520 = vsub.s32 0, %v1519
      %v1521 = vrot.slane %v1285, %v1520
      %v1522 = vlaneseq
      %v1523 = vshrl.u32 %v1522, 7
      %v1524 = vsub.s32 0, %v1523
      %v1525 = vrot.slane %v1286, %v1524
      %v1526 = vlaneseq
      %v1527 = vshrl.u32 %v1526, 7
      %v1528 = vsub.s32 0, %v1527
      %v1529 = vrot.slane %v1287, %v1528
      %1532 = vrot.lane.b32.xlu0 %v1516, 32
      %v1533 = vpop.permute.xlu0 %1532
      %1534 = vrot.lane.b32.xlu0 %v1517, 32
      %v1535 = vpop.permute.xlu0 %1534
      %v1536 = vsel %vm658, %v1533, %v1535
      %v1540 = vmul.f32 %v1521, %v1533
      %v1541 = vmul.f32 %v1525, %v1536
      %v1542 = vmul.f32 %v1529, %v1535
      %1546 = vrot.lane.b32.xlu0 %v1540, 96
      %v1547 = vpop.permute.xlu0 %1546
      %1548 = vrot.lane.b32.xlu0 %v1541, 96
      %v1549 = vpop.permute.xlu0 %1548
      %1550 = vrot.lane.b32.xlu0 %v1542, 96
      %v1551 = vpop.permute.xlu0 %1550
      %v1552 = vsel %vm881, %v1547, %v1549
      %v1553 = vsel %vm881, %v1549, %v1551
      %v1556 = vadd.f32 %v1514, %v1552
      %v1557 = vadd.f32 %v1515, %v1553
      %s1558 = scalar_lea.vmem %s6, 20
      %v1559 = vld [vmem:[%s1558] sm:$0xf]
      %v1561 = vsel %vm884, %v1559, 0
      %v1564 = vsel %vm602, %v1556, 0
      %v1567 = vsel %vm602, %v1557, 0
      %1569 = vmatprep.subr.mxu0 %v1567
      %1570 = vmatpush1.msra.mxu0 %v1564
      %1571 = vmatprep.subr.mxu0 0.0
      %1572 = vmatpush1.msra.mxu0 0.0
      %1573 = vmatprep.subr.mxu0 0.0
      %1574 = vmatpush1.msra.mxu0 0.0
      %1575 = vmatprep.subr.mxu0 0.0
      %1576 = vmatpush1.msra.mxu0 0.0
      %1577 = vmatprep.subr.mxu0 0.0
      %1578 = vmatpush1.msra.mxu0 0.0
      %1579 = vmatprep.subr.mxu0 0.0
      %1580 = vmatpush1.msra.mxu0 0.0
      %1581 = vmatprep.subr.mxu0 0.0
      %1582 = vmatpush1.msra.mxu0 0.0
      %1583 = vmatprep.subr.mxu0 0.0
      %1584 = vmatpush1.msra.mxu0 0.0
      %1585 = vmatprep.subr.mxu0 0.0
      %1586 = vmatpush1.msra.mxu0 0.0
      %1587 = vmatprep.subr.mxu0 0.0
      %1588 = vmatpush1.msra.mxu0 0.0
      %1589 = vmatprep.subr.mxu0 0.0
      %1590 = vmatpush1.msra.mxu0 0.0
      %1591 = vmatprep.subr.mxu0 0.0
      %1592 = vmatpush1.msra.mxu0 0.0
      %1593 = vmatprep.subr.mxu0 0.0
      %1594 = vmatpush1.msra.mxu0 0.0
      %1595 = vmatprep.subr.mxu0 0.0
      %1596 = vmatpush1.msra.mxu0 0.0
      %1597 = vmatprep.subr.mxu0 0.0
      %1598 = vmatpush1.msra.mxu0 0.0
      %1599 = vmatprep.subr.mxu0 0.0
      %1600 = vmatpush1.msra.mxu0 0.0
      %1601 = vmatprep.subr.mxu0 0.0
      %1602 = vmatpush1.msra.mxu0 0.0
      %1603 = vmatprep.subr.mxu0 0.0
      %1604 = vmatpush1.msra.mxu0 0.0
      %1605 = vmatprep.subr.mxu0 0.0
      %1606 = vmatpush1.msra.mxu0 0.0
      %1607 = vmatprep.subr.mxu0 0.0
      %1608 = vmatpush1.msra.mxu0 0.0
      %1609 = vmatprep.subr.mxu0 0.0
      %1610 = vmatpush1.msra.mxu0 0.0
      %1611 = vmatprep.subr.mxu0 0.0
      %1612 = vmatpush1.msra.mxu0 0.0
      %1613 = vmatprep.subr.mxu0 0.0
      %1614 = vmatpush1.msra.mxu0 0.0
      %1615 = vmatprep.subr.mxu0 0.0
      %1616 = vmatpush1.msra.mxu0 0.0
      %1617 = vmatprep.subr.mxu0 0.0
      %1618 = vmatpush1.msra.mxu0 0.0
      %1619 = vmatprep.subr.mxu0 0.0
      %1620 = vmatpush1.msra.mxu0 0.0
      %1621 = vmatprep.subr.mxu0 0.0
      %1622 = vmatpush1.msra.mxu0 0.0
      %1623 = vmatprep.subr.mxu0 0.0
      %1624 = vmatpush1.msra.mxu0 0.0
      %1625 = vmatprep.subr.mxu0 0.0
      %1626 = vmatpush1.msra.mxu0 0.0
      %1627 = vmatprep.subr.mxu0 0.0
      %1628 = vmatpush1.msra.mxu0 0.0
      %1629 = vmatprep.subr.mxu0 0.0
      %1630 = vmatpush1.msra.mxu0 0.0
      %1631 = vmatprep.subr.mxu0 0.0
      %1632 = vmatpush1.msra.mxu0 0.0
      %1633 = vmatprep.mubr.f32.mxu0 0.0
      %1634 = vmatmul.mubr.f32.gmra.mrb[0].mxu0 %v1561
      %v1635 = vpop.f32.mrb[0].mxu0
      %v1636 = vadd.f32 0.0, %v1635
      %v1637 = vpop.f32.mrb[0].mxu0
      %v1638 = vadd.f32 0.0, %v1637
      %1639 = vdwg.mxu0
      %v1641 = vsel %vm884, %v1092, 0
      %v1644 = vsel %vm602, %v1089, 0
      %v1647 = vsel %vm602, %v1090, 0
      %1649 = vmatprep.subr.mxu0 %v1647
      %1650 = vmatpush1.msra.mxu0 %v1644
      %1651 = vmatprep.subr.mxu0 0.0
      %1652 = vmatpush1.msra.mxu0 0.0
      %1653 = vmatprep.subr.mxu0 0.0
      %1654 = vmatpush1.msra.mxu0 0.0
      %1655 = vmatprep.subr.mxu0 0.0
      %1656 = vmatpush1.msra.mxu0 0.0
      %1657 = vmatprep.subr.mxu0 0.0
      %1658 = vmatpush1.msra.mxu0 0.0
      %1659 = vmatprep.subr.mxu0 0.0
      %1660 = vmatpush1.msra.mxu0 0.0
      %1661 = vmatprep.subr.mxu0 0.0
      %1662 = vmatpush1.msra.mxu0 0.0
      %1663 = vmatprep.subr.mxu0 0.0
      %1664 = vmatpush1.msra.mxu0 0.0
      %1665 = vmatprep.subr.mxu0 0.0
      %1666 = vmatpush1.msra.mxu0 0.0
      %1667 = vmatprep.subr.mxu0 0.0
      %1668 = vmatpush1.msra.mxu0 0.0
      %1669 = vmatprep.subr.mxu0 0.0
      %1670 = vmatpush1.msra.mxu0 0.0
      %1671 = vmatprep.subr.mxu0 0.0
      %1672 = vmatpush1.msra.mxu0 0.0
      %1673 = vmatprep.subr.mxu0 0.0
      %1674 = vmatpush1.msra.mxu0 0.0
      %1675 = vmatprep.subr.mxu0 0.0
      %1676 = vmatpush1.msra.mxu0 0.0
      %1677 = vmatprep.subr.mxu0 0.0
      %1678 = vmatpush1.msra.mxu0 0.0
      %1679 = vmatprep.subr.mxu0 0.0
      %1680 = vmatpush1.msra.mxu0 0.0
      %1681 = vmatprep.subr.mxu0 0.0
      %1682 = vmatpush1.msra.mxu0 0.0
      %1683 = vmatprep.subr.mxu0 0.0
      %1684 = vmatpush1.msra.mxu0 0.0
      %1685 = vmatprep.subr.mxu0 0.0
      %1686 = vmatpush1.msra.mxu0 0.0
      %1687 = vmatprep.subr.mxu0 0.0
      %1688 = vmatpush1.msra.mxu0 0.0
      %1689 = vmatprep.subr.mxu0 0.0
      %1690 = vmatpush1.msra.mxu0 0.0
      %1691 = vmatprep.subr.mxu0 0.0
      %1692 = vmatpush1.msra.mxu0 0.0
      %1693 = vmatprep.subr.mxu0 0.0
      %1694 = vmatpush1.msra.mxu0 0.0
      %1695 = vmatprep.subr.mxu0 0.0
      %1696 = vmatpush1.msra.mxu0 0.0
      %1697 = vmatprep.subr.mxu0 0.0
      %1698 = vmatpush1.msra.mxu0 0.0
      %1699 = vmatprep.subr.mxu0 0.0
      %1700 = vmatpush1.msra.mxu0 0.0
      %1701 = vmatprep.subr.mxu0 0.0
      %1702 = vmatpush1.msra.mxu0 0.0
      %1703 = vmatprep.subr.mxu0 0.0
      %1704 = vmatpush1.msra.mxu0 0.0
      %1705 = vmatprep.subr.mxu0 0.0
      %1706 = vmatpush1.msra.mxu0 0.0
      %1707 = vmatprep.subr.mxu0 0.0
      %1708 = vmatpush1.msra.mxu0 0.0
      %1709 = vmatprep.subr.mxu0 0.0
      %1710 = vmatpush1.msra.mxu0 0.0
      %1711 = vmatprep.subr.mxu0 0.0
      %1712 = vmatpush1.msra.mxu0 0.0
      %1713 = vmatprep.mubr.f32.mxu0 0.0
      %1714 = vmatmul.mubr.f32.gmra.mrb[0].mxu0 %v1641
      %v1715 = vpop.f32.mrb[0].mxu0
      %v1716 = vadd.f32 %v1636, %v1715
      %v1717 = vpop.f32.mrb[0].mxu0
      %v1718 = vadd.f32 %v1638, %v1717
      %1719 = vdwg.mxu0
      %1720 = vset.pattern.permute.xlu0 1
      %1721 = vperm.xlu0 %1720, %v350
      %v1722 = vpop.permute.xlu0 %1721
      %v1724 = vadd.f32 %v1716, %v1722
      %v1725 = vadd.f32 %v1718, %v1722
      %v1726 = vmax.f32 %v1724, 0.0
      %v1727 = vmax.f32 %v1725, 0.0
      %1730 = vrot.lane.b32.xlu0 %v594, 32
      %v1731 = vpop.permute.xlu0 %1730
      %1732 = vrot.lane.b32.xlu0 %v596, 32
      %v1733 = vpop.permute.xlu0 %1732
      %v1734 = vsel %vm658, %v1731, %v1733
      %vm1738 = vcmask 1043712
      %1739 = vst.msk [vmem:[#allocation2] sm:$0xf] %vm1738, %v1731
      %1740 = vst [vmem:[#allocation2 + $0x8] sm:$0xf] %v1734
      %vm1741 = vcmask 257024
      %1742 = vst.msk [vmem:[#allocation2 + $0x10] sm:$0xf] %vm1741, %v1733
      %v1745 = vrot.slane %v1726, 4
      %v1746 = vrot.slane %v1727, 4
      %1747 = vrot.lane.b32.xlu0 %v1745, 32
      %v1748 = vpop.permute.xlu0 %1747
      %1749 = vrot.lane.b32.xlu0 %v1746, 32
      %v1750 = vpop.permute.xlu0 %1749
      %v1751 = vsel %vm658, %v1748, %v1750
      %vm1755 = vcmask 1047812
      %1756 = vst.msk [vmem:[#allocation2] sm:$0xf0] %vm1755, %v1748
      %1757 = vst [vmem:[#allocation2 + $0x8] sm:$0xf0] %v1751
      %vm1758 = vcmask 261124
      %1759 = vst.msk [vmem:[#allocation2 + $0x10] sm:$0xf0] %vm1758, %v1750
      %v1760 = vld [vmem:[#allocation2] sm:$0xff]
      %v1761 = vld [vmem:[#allocation2 + $0x8] sm:$0xff]
      %v1762 = vld [vmem:[#allocation2 + $0x10] sm:$0xff]
      %1763 = vrot.lane.b32.xlu0 %v400, 15
      %v1764 = vpop.permute.xlu0 %1763
      %1765 = vrot.lane.b32.xlu0 %v401, 15
      %v1766 = vpop.permute.xlu0 %1765
      %vm1767 = vcmask 121856
      %v1768 = vsel %vm1767, %v1764, %v1766
      %v1772 = vmul.f32 %v1760, %v1764
      %v1773 = vmul.f32 %v1761, %v1768
      %v1774 = vmul.f32 %v1762, %v1766
      %1778 = vrot.lane.b32.xlu0 %v1772, 113
      %v1779 = vpop.permute.xlu0 %1778
      %1780 = vrot.lane.b32.xlu0 %v1773, 113
      %v1781 = vpop.permute.xlu0 %1780
      %1782 = vrot.lane.b32.xlu0 %v1774, 113
      %v1783 = vpop.permute.xlu0 %1782
      %vm1784 = vcmask 924672
      %v1785 = vsel %vm1784, %v1779, %v1781
      %v1786 = vsel %vm1784, %v1781, %v1783
      %1789 = vst [vmem:[#allocation3] sm:$0xff] %v1785
      %1790 = vst [vmem:[#allocation3 + $0x8] sm:$0xff] %v1786
      %v1791 = vld [vmem:[#allocation2] sm:$0xff]
      %v1792 = vld [vmem:[#allocation2 + $0x8] sm:$0xff]
      %v1793 = vld [vmem:[#allocation2 + $0x10] sm:$0xff]
      %1797 = vrot.lane.b32.xlu0 %v1791, 112
      %v1798 = vpop.permute.xlu0 %1797
      %1799 = vrot.lane.b32.xlu0 %v1792, 112
      %v1800 = vpop.permute.xlu0 %1799
      %1801 = vrot.lane.b32.xlu0 %v1793, 112
      %v1802 = vpop.permute.xlu0 %1801
      %v1803 = vsel %vm791, %v1798, %v1800
      %v1804 = vsel %vm791, %v1800, %v1802
      %1807 = vst [vmem:[#allocation3 + $0x10] sm:$0xff] %v1803
      %1808 = vst [vmem:[#allocation3 + $0x18] sm:$0xff] %v1804
      %v1809 = vld [vmem:[#allocation2] sm:$0xff]
      %v1810 = vld [vmem:[#allocation2 + $0x8] sm:$0xff]
      %v1811 = vld [vmem:[#allocation2 + $0x10] sm:$0xff]
      %1812 = vrot.lane.b32.xlu0 %v412, 17
      %v1813 = vpop.permute.xlu0 %1812
      %1814 = vrot.lane.b32.xlu0 %v413, 17
      %v1815 = vpop.permute.xlu0 %1814
      %vm1816 = vcmask 138240
      %v1817 = vsel %vm1816, %v1813, %v1815
      %v1821 = vmul.f32 %v1809, %v1813
      %v1822 = vmul.f32 %v1810, %v1817
      %v1823 = vmul.f32 %v1811, %v1815
      %1827 = vrot.lane.b32.xlu0 %v1821, 111
      %v1828 = vpop.permute.xlu0 %1827
      %1829 = vrot.lane.b32.xlu0 %v1822, 111
      %v1830 = vpop.permute.xlu0 %1829
      %1831 = vrot.lane.b32.xlu0 %v1823, 111
      %v1832 = vpop.permute.xlu0 %1831
      %vm1833 = vcmask 908288
      %v1834 = vsel %vm1833, %v1828, %v1830
      %v1835 = vsel %vm1833, %v1830, %v1832
      %1838 = vst [vmem:[#allocation3 + $0x20] sm:$0xff] %v1834
      %1839 = vst [vmem:[#allocation3 + $0x28] sm:$0xff] %v1835
      %v1840 = vld [vmem:[#allocation2] sm:$0xff]
      %v1841 = vld [vmem:[#allocation2 + $0x8] sm:$0xff]
      %v1842 = vld [vmem:[#allocation2 + $0x10] sm:$0xff]
      %v1843 = vmul.f32 %v1840, %v698
      %v1844 = vmul.f32 %v1841, %v702
      %v1845 = vmul.f32 %v1842, %v700
      %1849 = vrot.lane.b32.xlu0 %v1843, 97
      %v1850 = vpop.permute.xlu0 %1849
      %1851 = vrot.lane.b32.xlu0 %v1844, 97
      %v1852 = vpop.permute.xlu0 %1851
      %1853 = vrot.lane.b32.xlu0 %v1845, 97
      %v1854 = vpop.permute.xlu0 %1853
      %vm1855 = vcmask 793600
      %v1856 = vsel %vm1855, %v1850, %v1852
      %v1857 = vsel %vm1855, %v1852, %v1854
      %1860 = vst [vmem:[#allocation3 + $0x30] sm:$0xff] %v1856
      %1861 = vst [vmem:[#allocation3 + $0x38] sm:$0xff] %v1857
      %v1862 = vld [vmem:[#allocation2] sm:$0xff]
      %v1863 = vld [vmem:[#allocation2 + $0x8] sm:$0xff]
      %v1864 = vld [vmem:[#allocation2 + $0x10] sm:$0xff]
      %1868 = vrot.lane.b32.xlu0 %v1862, 96
      %v1869 = vpop.permute.xlu0 %1868
      %1870 = vrot.lane.b32.xlu0 %v1863, 96
      %v1871 = vpop.permute.xlu0 %1870
      %1872 = vrot.lane.b32.xlu0 %v1864, 96
      %v1873 = vpop.permute.xlu0 %1872
      %v1874 = vsel %vm881, %v1869, %v1871
      %v1875 = vsel %vm881, %v1871, %v1873
      %1878 = vst [vmem:[#allocation3 + $0x40] sm:$0xff] %v1874
      %1879 = vst [vmem:[#allocation3 + $0x48] sm:$0xff] %v1875
      %v1880 = vld [vmem:[#allocation2] sm:$0xff]
      %v1881 = vld [vmem:[#allocation2 + $0x8] sm:$0xff]
      %v1882 = vld [vmem:[#allocation2 + $0x10] sm:$0xff]
      %v1883 = vmul.f32 %v1880, %v730
      %v1884 = vmul.f32 %v1881, %v734
      %v1885 = vmul.f32 %v1882, %v732
      %1889 = vrot.lane.b32.xlu0 %v1883, 95
      %v1890 = vpop.permute.xlu0 %1889
      %1891 = vrot.lane.b32.xlu0 %v1884, 95
      %v1892 = vpop.permute.xlu0 %1891
      %1893 = vrot.lane.b32.xlu0 %v1885, 95
      %v1894 = vpop.permute.xlu0 %1893
      %vm1895 = vcmask 777216
      %v1896 = vsel %vm1895, %v1890, %v1892
      %v1897 = vsel %vm1895, %v1892, %v1894
      %1900 = vst [vmem:[#allocation3 + $0x50] sm:$0xff] %v1896
      %1901 = vst [vmem:[#allocation3 + $0x58] sm:$0xff] %v1897
      %v1902 = vld [vmem:[#allocation2] sm:$0xff]
      %v1903 = vld [vmem:[#allocation2 + $0x8] sm:$0xff]
      %v1904 = vld [vmem:[#allocation2 + $0x10] sm:$0xff]
      %1905 = vrot.lane.b32.xlu0 %v400, 47
      %v1906 = vpop.permute.xlu0 %1905
      %1907 = vrot.lane.b32.xlu0 %v401, 47
      %v1908 = vpop.permute.xlu0 %1907
      %vm1909 = vcmask 384000
      %v1910 = vsel %vm1909, %v1906, %v1908
      %v1914 = vmul.f32 %v1902, %v1906
      %v1915 = vmul.f32 %v1903, %v1910
      %v1916 = vmul.f32 %v1904, %v1908
      %1920 = vrot.lane.b32.xlu0 %v1914, 81
      %v1921 = vpop.permute.xlu0 %1920
      %1922 = vrot.lane.b32.xlu0 %v1915, 81
      %v1923 = vpop.permute.xlu0 %1922
      %1924 = vrot.lane.b32.xlu0 %v1916, 81
      %v1925 = vpop.permute.xlu0 %1924
      %vm1926 = vcmask 662528
      %v1927 = vsel %vm1926, %v1921, %v1923
      %v1928 = vsel %vm1926, %v1923, %v1925
      %1931 = vst [vmem:[#allocation3 + $0x60] sm:$0xff] %v1927
      %1932 = vst [vmem:[#allocation3 + $0x68] sm:$0xff] %v1928
      %v1933 = vld [vmem:[#allocation2] sm:$0xff]
      %v1934 = vld [vmem:[#allocation2 + $0x8] sm:$0xff]
      %v1935 = vld [vmem:[#allocation2 + $0x10] sm:$0xff]
      %1939 = vrot.lane.b32.xlu0 %v1933, 80
      %v1940 = vpop.permute.xlu0 %1939
      %1941 = vrot.lane.b32.xlu0 %v1934, 80
      %v1942 = vpop.permute.xlu0 %1941
      %1943 = vrot.lane.b32.xlu0 %v1935, 80
      %v1944 = vpop.permute.xlu0 %1943
      %vm1945 = vcmask 654336
      %v1946 = vsel %vm1945, %v1940, %v1942
      %v1947 = vsel %vm1945, %v1942, %v1944
      %1950 = vst [vmem:[#allocation3 + $0x70] sm:$0xff] %v1946
      %1951 = vst [vmem:[#allocation3 + $0x78] sm:$0xff] %v1947
      %v1952 = vld [vmem:[#allocation2] sm:$0xff]
      %v1953 = vld [vmem:[#allocation2 + $0x8] sm:$0xff]
      %v1954 = vld [vmem:[#allocation2 + $0x10] sm:$0xff]
      %1955 = vrot.lane.b32.xlu0 %v412, 49
      %v1956 = vpop.permute.xlu0 %1955
      %1957 = vrot.lane.b32.xlu0 %v413, 49
      %v1958 = vpop.permute.xlu0 %1957
      %vm1959 = vcmask 400384
      %v1960 = vsel %vm1959, %v1956, %v1958
      %v1964 = vmul.f32 %v1952, %v1956
      %v1965 = vmul.f32 %v1953, %v1960
      %v1966 = vmul.f32 %v1954, %v1958
      %1970 = vrot.lane.b32.xlu0 %v1964, 79
      %v1971 = vpop.permute.xlu0 %1970
      %1972 = vrot.lane.b32.xlu0 %v1965, 79
      %v1973 = vpop.permute.xlu0 %1972
      %1974 = vrot.lane.b32.xlu0 %v1966, 79
      %v1975 = vpop.permute.xlu0 %1974
      %vm1976 = vcmask 646144
      %v1977 = vsel %vm1976, %v1971, %v1973
      %v1978 = vsel %vm1976, %v1973, %v1975
      %1981 = vst [vmem:[#allocation3 + $0x80] sm:$0xff] %v1977
      %1982 = vst [vmem:[#allocation3 + $0x88] sm:$0xff] %v1978
      %v1983 = vld [vmem:[%s8] sm:$0xf]
      %v1984 = vld [vmem:[#allocation3] sm:$0xff]
      %v1985 = vld [vmem:[#allocation3 + $0x8] sm:$0xff]
      %v1986 = vld [vmem:[#allocation3 + $0x10] sm:$0xff]
      %v1987 = vld [vmem:[#allocation3 + $0x18] sm:$0xff]
      %v1988 = vld [vmem:[#allocation3 + $0x20] sm:$0xff]
      %v1989 = vld [vmem:[#allocation3 + $0x28] sm:$0xff]
      %v1990 = vld [vmem:[#allocation3 + $0x30] sm:$0xff]
      %v1991 = vld [vmem:[#allocation3 + $0x38] sm:$0xff]
      %v1992 = vld [vmem:[#allocation3 + $0x40] sm:$0xff]
      %v1993 = vld [vmem:[#allocation3 + $0x48] sm:$0xff]
      %v1994 = vld [vmem:[#allocation3 + $0x50] sm:$0xff]
      %v1995 = vld [vmem:[#allocation3 + $0x58] sm:$0xff]
      %v1996 = vld [vmem:[#allocation3 + $0x60] sm:$0xff]
      %v1997 = vld [vmem:[#allocation3 + $0x68] sm:$0xff]
      %v1998 = vld [vmem:[#allocation3 + $0x70] sm:$0xff]
      %v1999 = vld [vmem:[#allocation3 + $0x78] sm:$0xff]
      %v2000 = vld [vmem:[#allocation3 + $0x80] sm:$0xff]
      %v2001 = vld [vmem:[#allocation3 + $0x88] sm:$0xff]
      %2002 = vset.pattern.permute.xlu0 2
      %2003 = vperm.xlu0 %2002, %v350
      %v2004 = vpop.permute.xlu0 %2003
      %vm2006 = vcmask 588800
      %v2008 = vsel %vm2006, %v1983, 0
      %2010 = vmatprep.subr.mxu0 %v1985
      %2011 = vmatpush1.msra.mxu0 %v1984
      %2012 = vmatprep.subr.mxu0 %v1987
      %2013 = vmatpush1.msra.mxu0 %v1986
      %2014 = vmatprep.subr.mxu0 %v1989
      %2015 = vmatpush1.msra.mxu0 %v1988
      %2016 = vmatprep.subr.mxu0 %v1991
      %2017 = vmatpush1.msra.mxu0 %v1990
      %2018 = vmatprep.subr.mxu0 %v1993
      %2019 = vmatpush1.msra.mxu0 %v1992
      %2020 = vmatprep.subr.mxu0 %v1995
      %2021 = vmatpush1.msra.mxu0 %v1994
      %2022 = vmatprep.subr.mxu0 %v1997
      %2023 = vmatpush1.msra.mxu0 %v1996
      %2024 = vmatprep.subr.mxu0 %v1999
      %2025 = vmatpush1.msra.mxu0 %v1998
      %2026 = vmatprep.subr.mxu0 %v2001
      %2027 = vmatpush1.msra.mxu0 %v2000
      %2028 = vmatprep.subr.mxu0 0.0
      %2029 = vmatpush1.msra.mxu0 0.0
      %2030 = vmatprep.subr.mxu0 0.0
      %2031 = vmatpush1.msra.mxu0 0.0
      %2032 = vmatprep.subr.mxu0 0.0
      %2033 = vmatpush1.msra.mxu0 0.0
      %2034 = vmatprep.subr.mxu0 0.0
      %2035 = vmatpush1.msra.mxu0 0.0
      %2036 = vmatprep.subr.mxu0 0.0
      %2037 = vmatpush1.msra.mxu0 0.0
      %2038 = vmatprep.subr.mxu0 0.0
      %2039 = vmatpush1.msra.mxu0 0.0
      %2040 = vmatprep.subr.mxu0 0.0
      %2041 = vmatpush1.msra.mxu0 0.0
      %2042 = vmatprep.subr.mxu0 0.0
      %2043 = vmatpush1.msra.mxu0 0.0
      %2044 = vmatprep.subr.mxu0 0.0
      %2045 = vmatpush1.msra.mxu0 0.0
      %2046 = vmatprep.subr.mxu0 0.0
      %2047 = vmatpush1.msra.mxu0 0.0
      %2048 = vmatprep.subr.mxu0 0.0
      %2049 = vmatpush1.msra.mxu0 0.0
      %2050 = vmatprep.subr.mxu0 0.0
      %2051 = vmatpush1.msra.mxu0 0.0
      %2052 = vmatprep.subr.mxu0 0.0
      %2053 = vmatpush1.msra.mxu0 0.0
      %2054 = vmatprep.subr.mxu0 0.0
      %2055 = vmatpush1.msra.mxu0 0.0
      %2056 = vmatprep.subr.mxu0 0.0
      %2057 = vmatpush1.msra.mxu0 0.0
      %2058 = vmatprep.subr.mxu0 0.0
      %2059 = vmatpush1.msra.mxu0 0.0
      %2060 = vmatprep.subr.mxu0 0.0
      %2061 = vmatpush1.msra.mxu0 0.0
      %2062 = vmatprep.subr.mxu0 0.0
      %2063 = vmatpush1.msra.mxu0 0.0
      %2064 = vmatprep.subr.mxu0 0.0
      %2065 = vmatpush1.msra.mxu0 0.0
      %2066 = vmatprep.subr.mxu0 0.0
      %2067 = vmatpush1.msra.mxu0 0.0
      %2068 = vmatprep.subr.mxu0 0.0
      %2069 = vmatpush1.msra.mxu0 0.0
      %2070 = vmatprep.subr.mxu0 0.0
      %2071 = vmatpush1.msra.mxu0 0.0
      %2072 = vmatprep.subr.mxu0 0.0
      %2073 = vmatpush1.msra.mxu0 0.0
      %2074 = vmatprep.mubr.f32.mxu0 0.0
      %2075 = vmatmul.mubr.f32.gmra.mrb[0].mxu0 %v2008
      %v2076 = vpop.f32.mrb[0].mxu0
      %v2077 = vadd.f32 %v2004, %v2076
      %v2078 = vpop.f32.mrb[0].mxu0
      %v2079 = vadd.f32 %v2004, %v2078
      %2080 = vdwg.mxu0
      %v2081 = vmax.f32 %v2077, 0.0
      %v2082 = vmax.f32 %v2079, 0.0
      %v2085 = vcombine.low %v2081, %v2082
      %2087 = vst [vmem:[%s349] sm:$0xff] %v2085
      %p2088 = scmp.lt.s32.totalorder %s20, 1
      %s2089 = scalar_select %p2088, %s20, 1
      %s2090 = smul.addr %s2089, 2
      %s2091 = smul.addr %s2090, 4
      %s2092 = scalar_lea.vmem %s9, %s2091
      // Predicated region
      $region57: #{upsample_block1_forward.1} parent=55 // pred_check
        %p2093 = pneg %p237
      $region58: #{upsample_block1_forward.1} parent=55 // pred_check_branch
        %2095 = sbr.rel (%p2093) target = $region60
      $region59: #{upsample_block1_forward.1} parent=55 // pred_region
        _
      $region60: #{upsample_block1_forward.1} parent=55 // pred_fallthru
        _
    $region56: #{upsample_block1_forward.1} parent=5 // pred_fallthru
      _
    %p2096 = scmp.le.s32.totalorder 2, %s15
    // Predicated region
    $region61: #{upsample_block1_forward.1} parent=5 // pred_check
      %p2097 = pneg %p2096
    $region62: #{upsample_block1_forward.1} parent=5 // pred_check_branch
      %2099 = sbr.rel (%p2097) target = $region64
    $region63: #{upsample_block1_forward.1} parent=5 // pred_region
      %s2100 = ssub.s32 %s15, 2
      // Predicated region
      $region65: #{upsample_block1_forward.1} parent=63 // pred_check
        %p2101 = pneg %p243
      $region66: #{upsample_block1_forward.1} parent=63 // pred_check_branch
        %2103 = sbr.rel (%p2101) target = $region68
      $region67: #{upsample_block1_forward.1} parent=63 // pred_region
        %p2104 = scmp.lt.s32.totalorder %s21, 1
        %s2105 = scalar_select %p2104, %s21, 1
        %s2106 = smul.addr %s2105, 2
        %s2107 = smul.addr %s2106, 4
        %s2108 = scalar_lea.vmem %s9, %s2107
      $region68: #{upsample_block1_forward.1} parent=63 // pred_fallthru
        _
    $region64: #{upsample_block1_forward.1} parent=5 // pred_fallthru
      _
  $region6: #{upsample_block1_forward.1} parent=0 // loop_footer
    %s19 = sadd.s32 1, %s15
  $region7: #{upsample_block1_forward.1} parent=0 // loop_footer_branch
    %14 = sbr.rel target = $region3
  $region8: #{upsample_block1_forward.1} parent=0 // loop_exit
    _

</llo_original>
